<compile_context>
chip_gen: v7x
topology: tpu7x:2x2x1
jax: 0.10.0
libtpu: 0.0.40
codegen_flags: <defaults>
</compile_context>

<pallas_src>
import jax
import jax.numpy as jnp
from jax.experimental import pallas as pl
from jax.experimental.pallas import tpu as pltpu


# ----------------------------------------------------------------------------
# Fused kernel: encoder RNN -> decoder RNN -> output Linear
# ----------------------------------------------------------------------------
def _seq2seq_kernel(x_ref, w_ih_cat_ref, b_cat_ref,
                    enc_whh_ref, dec_whh_ref,
                    wout_ref, bout_ref,
                    out_ref, hn_ref):
    TB = x_ref.shape[0]                  # T * Bp (time-major, flattened)
    Bp, H = hn_ref.shape
    T = TB // Bp

    x = x_ref[...].astype(jnp.float32)                       # (T*Bp, D_in)

    # ONE hoisted input-projection GEMM for BOTH RNNs (merged weights).
    pre = (jnp.dot(x, w_ih_cat_ref[...],
                   preferred_element_type=jnp.float32)
           + b_cat_ref[...])                                  # (T*Bp, 2H)
    enc_pre = pre[:, :H]                                      # (T*Bp, H)
    dec_pre = pre[:, H:]                                      # (T*Bp, H)

    enc_whh = enc_whh_ref[...].astype(jnp.float32)            # (H, H)
    dec_whh = dec_whh_ref[...].astype(jnp.float32)            # (H, H)

    # ---- Encoder recurrence (serial; T static & small -> fully unrolled). ----
    # Per-step slices are sublane-aligned because Bp is a multiple of 8.
    h = jnp.zeros((Bp, H), jnp.float32)
    for t in range(T):
        h = jnp.tanh(enc_pre[t * Bp:(t + 1) * Bp, :]
                     + jnp.dot(h, enc_whh,
                               preferred_element_type=jnp.float32))
    hn_ref[...] = h.astype(hn_ref.dtype)                      # single store

    # ---- Decoder recurrence; hidden states stay in registers (no scratch). --
    hs = []
    for t in range(T):
        h = jnp.tanh(dec_pre[t * Bp:(t + 1) * Bp, :]
                     + jnp.dot(h, dec_whh,
                               preferred_element_type=jnp.float32))
        hs.append(h)
    h_dec = jnp.concatenate(hs, axis=0)                       # (T*Bp, H)

    # ---- Output Linear: one MXU call + one lane-dense unmasked store. -------
    y = (jnp.dot(h_dec, wout_ref[...],
                 preferred_element_type=jnp.float32)
         + bout_ref[...])                                     # (T*Bp, 128-pad)
    out_ref[...] = y.astype(out_ref.dtype)


# ----------------------------------------------------------------------------
# Wrapper (mirrors Seq2seq.forward: returns (out, h_n))
# ----------------------------------------------------------------------------
def seq2seq_forward(params, x, target, batch_size):
    total_seq = target.shape[0]          # kept for parity with the reference
    del total_seq, batch_size

    T, B, D = x.shape
    H = params["enc_w_hh"].shape[0]
    D_out = params["dec_w_out"].shape[1]

    SUBLANE, LANE = 8, 128
    Bp = max(SUBLANE, ((B + SUBLANE - 1) // SUBLANE) * SUBLANE)   # sublane-pad batch
    Dp = max(LANE, ((D_out + LANE - 1) // LANE) * LANE)           # lane-pad out dim

    # Fold the two RNN biases and MERGE the two input projections into one GEMM.
    w_ih_cat = jnp.concatenate([params["enc_w_ih"], params["dec_w_ih"]], axis=1)  # (D, 2H)
    b_cat = jnp.concatenate([params["enc_b_ih"] + params["enc_b_hh"],
                             params["dec_b_ih"] + params["dec_b_hh"]], axis=1)    # (1, 2H)

    # Lane-dense output weights/bias (zero-pad extra lanes -> exact result).
    w_out = jnp.zeros((H, Dp), jnp.float32).at[:, :D_out].set(params["dec_w_out"])
    b_out = jnp.zeros((1, Dp), jnp.float32).at[:, :D_out].set(params["dec_b_out"])

    # Sublane-pad batch with zeros (recurrence is row-independent -> exact),
    # flatten time-major to keep all in-kernel indexing 2-D and static.
    x_p = jnp.zeros((T, Bp, D), x.dtype).at[:, :B, :].set(x)
    x2d = x_p.reshape(T * Bp, D)

    vmem = pl.BlockSpec(memory_space=pltpu.MemorySpace.VMEM)
    out2d, h_n = pl.pallas_call(
        _seq2seq_kernel,
        out_shape=(
            jax.ShapeDtypeStruct((T * Bp, Dp), x.dtype),
            jax.ShapeDtypeStruct((Bp, H), x.dtype),
        ),
        in_specs=[vmem] * 7,
        out_specs=(vmem, vmem),
    )(x2d, w_ih_cat, b_cat,
      params["enc_w_hh"], params["dec_w_hh"],
      w_out, b_out)

    out = out2d.reshape(T, Bp, Dp)[:, :B, :D_out]
    return out, h_n[:B, :]


# ----------------------------------------------------------------------------
# Pure-JAX reference (for correctness check)
# ----------------------------------------------------------------------------
def _rnn_ref(x, h0, w_ih, w_hh, b_ih, b_hh):
    def step(h, x_t):
        h_new = jnp.tanh(x_t @ w_ih + h @ w_hh + b_ih[0] + b_hh[0])
        return h_new, h_new
    h_n, r_out = jax.lax.scan(step, h0, x)
    return r_out, h_n


def seq2seq_ref(params, x, target, batch_size):
    B = x.shape[1]
    H = params["enc_w_hh"].shape[0]
    h0 = jnp.zeros((B, H), dtype=x.dtype)
    _r, h_n = _rnn_ref(x, h0, params["enc_w_ih"], params["enc_w_hh"],
                       params["enc_b_ih"], params["enc_b_hh"])
    dec_h, _ = _rnn_ref(x, h_n, params["dec_w_ih"], params["dec_w_hh"],
                        params["dec_b_ih"], params["dec_b_hh"])
    out = dec_h @ params["dec_w_out"] + params["dec_b_out"][0]
    return out, h_n


# ----------------------------------------------------------------------------
# Main
# ----------------------------------------------------------------------------
if __name__ == "__main__":
    T, B, D_IN, H, D_OUT = 8, 2, 4, 32, 4

    key = jax.random.PRNGKey(0)
    ks = jax.random.split(key, 12)
    s = 1.0 / jnp.sqrt(H)   # PyTorch-style uniform(-1/sqrt(H), 1/sqrt(H))

    def u(k, shape):
        return jax.random.uniform(k, shape, jnp.float32, -s, s)

    params = {
        # weights stored pre-transposed: (in_features, out_features)
        "enc_w_ih": u(ks[0], (D_IN, H)),
        "enc_w_hh": u(ks[1], (H, H)),
        "enc_b_ih": u(ks[2], (1, H)),
        "enc_b_hh": u(ks[3], (1, H)),
        "dec_w_ih": u(ks[4], (D_IN, H)),
        "dec_w_hh": u(ks[5], (H, H)),
        "dec_b_ih": u(ks[6], (1, H)),
        "dec_b_hh": u(ks[7], (1, H)),
        "dec_w_out": u(ks[8], (H, D_OUT)),
        "dec_b_out": u(ks[9], (1, D_OUT)),
    }

    x = jax.random.normal(ks[10], (T, B, D_IN), jnp.float32)
    target = jax.random.normal(ks[11], (T, B, D_OUT), jnp.float32)

    out, h_n = seq2seq_forward(params, x, target, B)
    out = jax.block_until_ready(out)
    h_n = jax.block_until_ready(h_n)

    out_ref, h_n_ref = seq2seq_ref(params, x, target, B)
    assert out.shape == (T, B, D_OUT) and h_n.shape == (B, H)
    assert jnp.allclose(out, out_ref, atol=1e-5, rtol=1e-5)
    assert jnp.allclose(h_n, h_n_ref, atol=1e-5, rtol=1e-5)

    print("KERNEL_OK")
</pallas_src>

<mosaic_0001>
module attributes {stable_mosaic.version = 11 : i64} {
  func.func @_seq2seq_kernel(%arg0: memref<64x4xf32, #tpu.memory_space<vmem>>, %arg1: memref<4x64xf32, #tpu.memory_space<vmem>>, %arg2: memref<1x64xf32, #tpu.memory_space<vmem>>, %arg3: memref<32x32xf32, #tpu.memory_space<vmem>>, %arg4: memref<32x32xf32, #tpu.memory_space<vmem>>, %arg5: memref<32x128xf32, #tpu.memory_space<vmem>>, %arg6: memref<1x128xf32, #tpu.memory_space<vmem>>, %arg7: memref<64x128xf32, #tpu.memory_space<vmem>>, %arg8: memref<8x32xf32, #tpu.memory_space<vmem>>) attributes {dimension_semantics = [], scalar_prefetch = 0 : i64, scratch_operands = 0 : i64, tpu.core_type = #tpu.core_type<tc>} {
    %c0 = arith.constant 0 : index
    %c0_0 = arith.constant 0 : index
    %0 = vector.load %arg0[%c0, %c0_0] : memref<64x4xf32, #tpu.memory_space<vmem>>, vector<64x4xf32>
    %c0_1 = arith.constant 0 : index
    %c0_2 = arith.constant 0 : index
    %1 = vector.load %arg1[%c0_1, %c0_2] : memref<4x64xf32, #tpu.memory_space<vmem>>, vector<4x64xf32>
    %cst = arith.constant dense<0.000000e+00> : vector<64x64xf32>
    %2 = tpu.matmul %0, %1, %cst {dimension_numbers = #tpu.dot_dimension_numbers<[1], [0], [0], [1], [0, 0, 1, 1], [], []>} : vector<64x4xf32>, vector<4x64xf32>, vector<64x64xf32> -> vector<64x64xf32>
    %c0_3 = arith.constant 0 : index
    %c0_4 = arith.constant 0 : index
    %3 = vector.load %arg2[%c0_3, %c0_4] : memref<1x64xf32, #tpu.memory_space<vmem>>, vector<1x64xf32>
    %4 = vector.broadcast %3 : vector<1x64xf32> to vector<64x64xf32>
    %5 = arith.addf %2, %4 : vector<64x64xf32>
    %6 = vector.extract_strided_slice %5 {offsets = [0, 0], sizes = [64, 32], strides = [1, 1]} : vector<64x64xf32> to vector<64x32xf32>
    %7 = vector.extract_strided_slice %5 {offsets = [0, 32], sizes = [64, 32], strides = [1, 1]} : vector<64x64xf32> to vector<64x32xf32>
    %c0_5 = arith.constant 0 : index
    %c0_6 = arith.constant 0 : index
    %8 = vector.load %arg3[%c0_5, %c0_6] : memref<32x32xf32, #tpu.memory_space<vmem>>, vector<32x32xf32>
    %c0_7 = arith.constant 0 : index
    %c0_8 = arith.constant 0 : index
    %9 = vector.load %arg4[%c0_7, %c0_8] : memref<32x32xf32, #tpu.memory_space<vmem>>, vector<32x32xf32>
    %cst_9 = arith.constant 0.000000e+00 : f32
    %10 = vector.broadcast %cst_9 : f32 to vector<8x32xf32>
    %11 = vector.extract_strided_slice %6 {offsets = [0, 0], sizes = [8, 32], strides = [1, 1]} : vector<64x32xf32> to vector<8x32xf32>
    %cst_10 = arith.constant dense<0.000000e+00> : vector<8x32xf32>
    %12 = tpu.matmul %10, %8, %cst_10 {dimension_numbers = #tpu.dot_dimension_numbers<[1], [0], [0], [1], [0, 0, 1, 1], [], []>} : vector<8x32xf32>, vector<32x32xf32>, vector<8x32xf32> -> vector<8x32xf32>
    %13 = arith.addf %11, %12 : vector<8x32xf32>
    %14 = math.tanh %13 : vector<8x32xf32>
    %15 = vector.extract_strided_slice %6 {offsets = [8, 0], sizes = [8, 32], strides = [1, 1]} : vector<64x32xf32> to vector<8x32xf32>
    %cst_11 = arith.constant dense<0.000000e+00> : vector<8x32xf32>
    %16 = tpu.matmul %14, %8, %cst_11 {dimension_numbers = #tpu.dot_dimension_numbers<[1], [0], [0], [1], [0, 0, 1, 1], [], []>} : vector<8x32xf32>, vector<32x32xf32>, vector<8x32xf32> -> vector<8x32xf32>
    %17 = arith.addf %15, %16 : vector<8x32xf32>
    %18 = math.tanh %17 : vector<8x32xf32>
    %19 = vector.extract_strided_slice %6 {offsets = [16, 0], sizes = [8, 32], strides = [1, 1]} : vector<64x32xf32> to vector<8x32xf32>
    %cst_12 = arith.constant dense<0.000000e+00> : vector<8x32xf32>
    %20 = tpu.matmul %18, %8, %cst_12 {dimension_numbers = #tpu.dot_dimension_numbers<[1], [0], [0], [1], [0, 0, 1, 1], [], []>} : vector<8x32xf32>, vector<32x32xf32>, vector<8x32xf32> -> vector<8x32xf32>
    %21 = arith.addf %19, %20 : vector<8x32xf32>
    %22 = math.tanh %21 : vector<8x32xf32>
    %23 = vector.extract_strided_slice %6 {offsets = [24, 0], sizes = [8, 32], strides = [1, 1]} : vector<64x32xf32> to vector<8x32xf32>
    %cst_13 = arith.constant dense<0.000000e+00> : vector<8x32xf32>
    %24 = tpu.matmul %22, %8, %cst_13 {dimension_numbers = #tpu.dot_dimension_numbers<[1], [0], [0], [1], [0, 0, 1, 1], [], []>} : vector<8x32xf32>, vector<32x32xf32>, vector<8x32xf32> -> vector<8x32xf32>
    %25 = arith.addf %23, %24 : vector<8x32xf32>
    %26 = math.tanh %25 : vector<8x32xf32>
    %27 = vector.extract_strided_slice %6 {offsets = [32, 0], sizes = [8, 32], strides = [1, 1]} : vector<64x32xf32> to vector<8x32xf32>
    %cst_14 = arith.constant dense<0.000000e+00> : vector<8x32xf32>
    %28 = tpu.matmul %26, %8, %cst_14 {dimension_numbers = #tpu.dot_dimension_numbers<[1], [0], [0], [1], [0, 0, 1, 1], [], []>} : vector<8x32xf32>, vector<32x32xf32>, vector<8x32xf32> -> vector<8x32xf32>
    %29 = arith.addf %27, %28 : vector<8x32xf32>
    %30 = math.tanh %29 : vector<8x32xf32>
    %31 = vector.extract_strided_slice %6 {offsets = [40, 0], sizes = [8, 32], strides = [1, 1]} : vector<64x32xf32> to vector<8x32xf32>
    %cst_15 = arith.constant dense<0.000000e+00> : vector<8x32xf32>
    %32 = tpu.matmul %30, %8, %cst_15 {dimension_numbers = #tpu.dot_dimension_numbers<[1], [0], [0], [1], [0, 0, 1, 1], [], []>} : vector<8x32xf32>, vector<32x32xf32>, vector<8x32xf32> -> vector<8x32xf32>
    %33 = arith.addf %31, %32 : vector<8x32xf32>
    %34 = math.tanh %33 : vector<8x32xf32>
    %35 = vector.extract_strided_slice %6 {offsets = [48, 0], sizes = [8, 32], strides = [1, 1]} : vector<64x32xf32> to vector<8x32xf32>
    %cst_16 = arith.constant dense<0.000000e+00> : vector<8x32xf32>
    %36 = tpu.matmul %34, %8, %cst_16 {dimension_numbers = #tpu.dot_dimension_numbers<[1], [0], [0], [1], [0, 0, 1, 1], [], []>} : vector<8x32xf32>, vector<32x32xf32>, vector<8x32xf32> -> vector<8x32xf32>
    %37 = arith.addf %35, %36 : vector<8x32xf32>
    %38 = math.tanh %37 : vector<8x32xf32>
    %39 = vector.extract_strided_slice %6 {offsets = [56, 0], sizes = [8, 32], strides = [1, 1]} : vector<64x32xf32> to vector<8x32xf32>
    %cst_17 = arith.constant dense<0.000000e+00> : vector<8x32xf32>
    %40 = tpu.matmul %38, %8, %cst_17 {dimension_numbers = #tpu.dot_dimension_numbers<[1], [0], [0], [1], [0, 0, 1, 1], [], []>} : vector<8x32xf32>, vector<32x32xf32>, vector<8x32xf32> -> vector<8x32xf32>
    %41 = arith.addf %39, %40 : vector<8x32xf32>
    %42 = math.tanh %41 : vector<8x32xf32>
    %c0_18 = arith.constant 0 : index
    %c0_19 = arith.constant 0 : index
    %43 = vector.load %arg8[%c0_18, %c0_19] : memref<8x32xf32, #tpu.memory_space<vmem>>, vector<8x32xf32>
    tpu.vector_store %arg8[%c0_18, %c0_19], %42 {strides = array<i32>} : memref<8x32xf32, #tpu.memory_space<vmem>>, vector<8x32xf32>,
    %44 = vector.extract_strided_slice %7 {offsets = [0, 0], sizes = [8, 32], strides = [1, 1]} : vector<64x32xf32> to vector<8x32xf32>
    %cst_20 = arith.constant dense<0.000000e+00> : vector<8x32xf32>
    %45 = tpu.matmul %42, %9, %cst_20 {dimension_numbers = #tpu.dot_dimension_numbers<[1], [0], [0], [1], [0, 0, 1, 1], [], []>} : vector<8x32xf32>, vector<32x32xf32>, vector<8x32xf32> -> vector<8x32xf32>
    %46 = arith.addf %44, %45 : vector<8x32xf32>
    %47 = math.tanh %46 : vector<8x32xf32>
    %48 = vector.extract_strided_slice %7 {offsets = [8, 0], sizes = [8, 32], strides = [1, 1]} : vector<64x32xf32> to vector<8x32xf32>
    %cst_21 = arith.constant dense<0.000000e+00> : vector<8x32xf32>
    %49 = tpu.matmul %47, %9, %cst_21 {dimension_numbers = #tpu.dot_dimension_numbers<[1], [0], [0], [1], [0, 0, 1, 1], [], []>} : vector<8x32xf32>, vector<32x32xf32>, vector<8x32xf32> -> vector<8x32xf32>
    %50 = arith.addf %48, %49 : vector<8x32xf32>
    %51 = math.tanh %50 : vector<8x32xf32>
    %52 = vector.extract_strided_slice %7 {offsets = [16, 0], sizes = [8, 32], strides = [1, 1]} : vector<64x32xf32> to vector<8x32xf32>
    %cst_22 = arith.constant dense<0.000000e+00> : vector<8x32xf32>
    %53 = tpu.matmul %51, %9, %cst_22 {dimension_numbers = #tpu.dot_dimension_numbers<[1], [0], [0], [1], [0, 0, 1, 1], [], []>} : vector<8x32xf32>, vector<32x32xf32>, vector<8x32xf32> -> vector<8x32xf32>
    %54 = arith.addf %52, %53 : vector<8x32xf32>
    %55 = math.tanh %54 : vector<8x32xf32>
    %56 = vector.extract_strided_slice %7 {offsets = [24, 0], sizes = [8, 32], strides = [1, 1]} : vector<64x32xf32> to vector<8x32xf32>
    %cst_23 = arith.constant dense<0.000000e+00> : vector<8x32xf32>
    %57 = tpu.matmul %55, %9, %cst_23 {dimension_numbers = #tpu.dot_dimension_numbers<[1], [0], [0], [1], [0, 0, 1, 1], [], []>} : vector<8x32xf32>, vector<32x32xf32>, vector<8x32xf32> -> vector<8x32xf32>
    %58 = arith.addf %56, %57 : vector<8x32xf32>
    %59 = math.tanh %58 : vector<8x32xf32>
    %60 = vector.extract_strided_slice %7 {offsets = [32, 0], sizes = [8, 32], strides = [1, 1]} : vector<64x32xf32> to vector<8x32xf32>
    %cst_24 = arith.constant dense<0.000000e+00> : vector<8x32xf32>
    %61 = tpu.matmul %59, %9, %cst_24 {dimension_numbers = #tpu.dot_dimension_numbers<[1], [0], [0], [1], [0, 0, 1, 1], [], []>} : vector<8x32xf32>, vector<32x32xf32>, vector<8x32xf32> -> vector<8x32xf32>
    %62 = arith.addf %60, %61 : vector<8x32xf32>
    %63 = math.tanh %62 : vector<8x32xf32>
    %64 = vector.extract_strided_slice %7 {offsets = [40, 0], sizes = [8, 32], strides = [1, 1]} : vector<64x32xf32> to vector<8x32xf32>
    %cst_25 = arith.constant dense<0.000000e+00> : vector<8x32xf32>
    %65 = tpu.matmul %63, %9, %cst_25 {dimension_numbers = #tpu.dot_dimension_numbers<[1], [0], [0], [1], [0, 0, 1, 1], [], []>} : vector<8x32xf32>, vector<32x32xf32>, vector<8x32xf32> -> vector<8x32xf32>
    %66 = arith.addf %64, %65 : vector<8x32xf32>
    %67 = math.tanh %66 : vector<8x32xf32>
    %68 = vector.extract_strided_slice %7 {offsets = [48, 0], sizes = [8, 32], strides = [1, 1]} : vector<64x32xf32> to vector<8x32xf32>
    %cst_26 = arith.constant dense<0.000000e+00> : vector<8x32xf32>
    %69 = tpu.matmul %67, %9, %cst_26 {dimension_numbers = #tpu.dot_dimension_numbers<[1], [0], [0], [1], [0, 0, 1, 1], [], []>} : vector<8x32xf32>, vector<32x32xf32>, vector<8x32xf32> -> vector<8x32xf32>
    %70 = arith.addf %68, %69 : vector<8x32xf32>
    %71 = math.tanh %70 : vector<8x32xf32>
    %72 = vector.extract_strided_slice %7 {offsets = [56, 0], sizes = [8, 32], strides = [1, 1]} : vector<64x32xf32> to vector<8x32xf32>
    %cst_27 = arith.constant dense<0.000000e+00> : vector<8x32xf32>
    %73 = tpu.matmul %71, %9, %cst_27 {dimension_numbers = #tpu.dot_dimension_numbers<[1], [0], [0], [1], [0, 0, 1, 1], [], []>} : vector<8x32xf32>, vector<32x32xf32>, vector<8x32xf32> -> vector<8x32xf32>
    %74 = arith.addf %72, %73 : vector<8x32xf32>
    %75 = math.tanh %74 : vector<8x32xf32>
    %76 = tpu.concatenate %47, %51, %55, %59, %63, %67, %71, %75 in 0 : vector<8x32xf32>, vector<8x32xf32>, vector<8x32xf32>, vector<8x32xf32>, vector<8x32xf32>, vector<8x32xf32>, vector<8x32xf32>, vector<8x32xf32> -> vector<64x32xf32>
    %c0_28 = arith.constant 0 : index
    %c0_29 = arith.constant 0 : index
    %77 = vector.load %arg5[%c0_28, %c0_29] : memref<32x128xf32, #tpu.memory_space<vmem>>, vector<32x128xf32>
    %cst_30 = arith.constant dense<0.000000e+00> : vector<64x128xf32>
    %78 = tpu.matmul %76, %77, %cst_30 {dimension_numbers = #tpu.dot_dimension_numbers<[1], [0], [0], [1], [0, 0, 1, 1], [], []>} : vector<64x32xf32>, vector<32x128xf32>, vector<64x128xf32> -> vector<64x128xf32>
    %c0_31 = arith.constant 0 : index
    %c0_32 = arith.constant 0 : index
    %79 = vector.load %arg6[%c0_31, %c0_32] : memref<1x128xf32, #tpu.memory_space<vmem>>, vector<1x128xf32>
    %80 = vector.broadcast %79 : vector<1x128xf32> to vector<64x128xf32>
    %81 = arith.addf %78, %80 : vector<64x128xf32>
    %c0_33 = arith.constant 0 : index
    %c0_34 = arith.constant 0 : index
    %82 = vector.load %arg7[%c0_33, %c0_34] : memref<64x128xf32, #tpu.memory_space<vmem>>, vector<64x128xf32>
    tpu.vector_store %arg7[%c0_33, %c0_34], %81 {strides = array<i32>} : memref<64x128xf32, #tpu.memory_space<vmem>>, vector<64x128xf32>,
    return
  }
}

</mosaic_0001>

<llo_original>
// kernel: tpu_custom_call.1
$region0: #{tpu_custom_call.1}
  #allocation0 [shape = 'u32[]', space=smem, size = 0x4, offset = 0x4, fixed_abs, tag = 'smem constant byte address 0x4 - core index']
  #allocation1 [shape = 'u32[144,128]{1,0:T(1,128)}', space=vmem, size = 0x12000, scoped, tag = 'internal scratch']
  %s0 = inlined_call_operand.vmem [shape: f32[64,4], index: 0, kind: input, shape index: {}]
  %s1 = inlined_call_operand.vmem [shape: f32[4,64], index: 1, kind: input, shape index: {}]
  %s2 = inlined_call_operand.vmem [shape: f32[1,64], index: 2, kind: input, shape index: {}]
  %s3 = inlined_call_operand.vmem [shape: f32[32,32], index: 3, kind: input, shape index: {}]
  %s4 = inlined_call_operand.vmem [shape: f32[32,32], index: 4, kind: input, shape index: {}]
  %s5 = inlined_call_operand.hbm [shape: f32[32,128], index: 5, kind: input, shape index: {}]
  %s6 = inlined_call_operand.vmem [shape: f32[1,128], index: 6, kind: input, shape index: {}]
  %s7 = inlined_call_operand.hbm [shape: f32[64,128], index: 7, kind: output, shape index: {0}]
  %s8 = inlined_call_operand.hbm [shape: f32[8,32], index: 8, kind: output, shape index: {1}]
  %9 = xla_tuple %s7, %s8
  %s10 = sld [smem:[#allocation0]]
  $region50: #{tpu_custom_call.1} parent=0
    _
  %s12 = ssub.s32 1, %s10
  %s13 = scalar_select 0, %s12, %s10
  $region1: #{tpu_custom_call.1} parent=0
    #allocation2 [shape = 'u8[16384]{0}', space=vmem, size = 0x4000, scoped, tag = 'input window, operand 5, single buffered']
    #allocation3 [shape = 's32[1]{0}', space=sflag, size = 0x4, scoped, tag = 'scoped memory for tpu_custom_call.1']
    #allocation4 [shape = 's32[1]{0}', space=sflag, size = 0x4, scoped, tag = 'scoped memory for tpu_custom_call.1']
    #allocation5 [shape = 'u8[32768]{0}', space=vmem, size = 0x8000, scoped, tag = 'output window, operand 0, single buffered']
    #allocation6 [shape = 'u8[4096]{0}', space=vmem, size = 0x1000, scoped, tag = 'output window, operand 1, single buffered']
    #allocation7 [shape = 's32[1]{0}', space=sflag, size = 0x4, scoped, tag = 'scoped memory for tpu_custom_call.1']
    %14 = vsyncpa [#allocation3], 0
    %15 = vsyncpa [#allocation4], 0
    %16 = vsyncpa [#allocation7], 0
    // Predicated region
    $region2: #{tpu_custom_call.1} parent=1 // pred_check
      _
    $region3: #{tpu_custom_call.1} parent=1 // pred_check_branch
      %18 = sbr.rel (0) target = $region5
    $region4: #{tpu_custom_call.1} parent=1 // pred_region
      _
    $region5: #{tpu_custom_call.1} parent=1 // pred_fallthru
      _
    // Predicated region
    $region6: #{tpu_custom_call.1} parent=1 // pred_check
      _
    $region7: #{tpu_custom_call.1} parent=1 // pred_check_branch
      %20 = sbr.rel (0) target = $region9
    $region8: #{tpu_custom_call.1} parent=1 // pred_region
      _
    $region9: #{tpu_custom_call.1} parent=1 // pred_fallthru
      _
    // Predicated region
    $region10: #{tpu_custom_call.1} parent=1 // pred_check
      _
    $region11: #{tpu_custom_call.1} parent=1 // pred_check_branch
      %22 = sbr.rel (0) target = $region13
    $region12: #{tpu_custom_call.1} parent=1 // pred_region
      _
    $region13: #{tpu_custom_call.1} parent=1 // pred_fallthru
      _
    // Predicated region
    $region14: #{tpu_custom_call.1} parent=1 // pred_check
      _
    $region15: #{tpu_custom_call.1} parent=1 // pred_check_branch
      %24 = sbr.rel (0) target = $region17
    $region16: #{tpu_custom_call.1} parent=1 // pred_region
      _
    $region17: #{tpu_custom_call.1} parent=1 // pred_fallthru
      _
    // Predicated region
    $region18: #{tpu_custom_call.1} parent=1 // pred_check
      _
    $region19: #{tpu_custom_call.1} parent=1 // pred_check_branch
      %26 = sbr.rel (0) target = $region21
    $region20: #{tpu_custom_call.1} parent=1 // pred_region
      _
    $region21: #{tpu_custom_call.1} parent=1 // pred_fallthru
      _
    // Predicated region
    $region22: #{tpu_custom_call.1} parent=1 // pred_check
      _
    $region23: #{tpu_custom_call.1} parent=1 // pred_check_branch
      %28 = sbr.rel (0) target = $region25
    $region24: #{tpu_custom_call.1} parent=1 // pred_region
      %s30 = ssub.s32 512, 512
      %31 = vsyncadd [#allocation3], %s30
      %s32 = sshll.u32 [#allocation2], 4
      %s33 = int_to_ptr.vmem [resolvable:$true] %s32
      %38 = dma.hbm_to_vmem [thread:$0]  %s5, 512, %s33, [#allocation3], 128, 128, 8
    $region25: #{tpu_custom_call.1} parent=1 // pred_fallthru
      _
    // Predicated region
    $region26: #{tpu_custom_call.1} parent=1 // pred_check
      _
    $region27: #{tpu_custom_call.1} parent=1 // pred_check_branch
      %40 = sbr.rel (0) target = $region29
    $region28: #{tpu_custom_call.1} parent=1 // pred_region
      _
    $region29: #{tpu_custom_call.1} parent=1 // pred_fallthru
      _
    // Predicated region
    $region30: #{tpu_custom_call.1} parent=1 // pred_check
      _
    $region31: #{tpu_custom_call.1} parent=1 // pred_check_branch
      %42 = sbr.rel (0) target = $region33
    $region32: #{tpu_custom_call.1} parent=1 // pred_region
      %43 = dma.done [#allocation3], 512
    $region33: #{tpu_custom_call.1} parent=1 // pred_fallthru
      _
    %v44 = vld [vmem:[%s0] sm:$0xff]
    %v45 = vld [vmem:[%s0 + $0x8] sm:$0xff]
    %v46 = vld [vmem:[%s0 + $0x10] sm:$0xff]
    %v47 = vld [vmem:[%s0 + $0x18] sm:$0xff]
    %v48 = vld [vmem:[%s0 + $0x20] sm:$0xff]
    %v49 = vld [vmem:[%s0 + $0x28] sm:$0xff]
    %v50 = vld [vmem:[%s0 + $0x30] sm:$0xff]
    %v51 = vld [vmem:[%s0 + $0x38] sm:$0xff]
    %v52 = vld [vmem:[%s1] sm:$0xf]
    %v53 = vld [vmem:[%s2] sm:$0x1]
    %v55 = vlaneseq
    %v56 = vshrl.u32 %v55, 7
    %v57 = vsub.s32 0, %v56
    %v58 = vrot.slane %v53, %v57
    %vm60 = vcmask 31744
    %v62 = vsel %vm60, %v44, 0
    %v65 = vsel %vm60, %v45, 0
    %v68 = vsel %vm60, %v46, 0
    %v71 = vsel %vm60, %v47, 0
    %v74 = vsel %vm60, %v48, 0
    %v77 = vsel %vm60, %v49, 0
    %v80 = vsel %vm60, %v50, 0
    %v83 = vsel %vm60, %v51, 0
    %vm85 = vcmask 1043456
    %v87 = vsel %vm85, %v52, 0
    %89 = vmatprep.subr.mxu0 0.0
    %90 = vmatpush1.msra.mxu0 %v87
    %91 = vmatprep.subr.mxu0 0.0
    %92 = vmatpush1.msra.mxu0 0.0
    %93 = vmatprep.subr.mxu0 0.0
    %94 = vmatpush1.msra.mxu0 0.0
    %95 = vmatprep.subr.mxu0 0.0
    %96 = vmatpush1.msra.mxu0 0.0
    %97 = vmatprep.subr.mxu0 0.0
    %98 = vmatpush1.msra.mxu0 0.0
    %99 = vmatprep.subr.mxu0 0.0
    %100 = vmatpush1.msra.mxu0 0.0
    %101 = vmatprep.subr.mxu0 0.0
    %102 = vmatpush1.msra.mxu0 0.0
    %103 = vmatprep.subr.mxu0 0.0
    %104 = vmatpush1.msra.mxu0 0.0
    %105 = vmatprep.subr.mxu0 0.0
    %106 = vmatpush1.msra.mxu0 0.0
    %107 = vmatprep.subr.mxu0 0.0
    %108 = vmatpush1.msra.mxu0 0.0
    %109 = vmatprep.subr.mxu0 0.0
    %110 = vmatpush1.msra.mxu0 0.0
    %111 = vmatprep.subr.mxu0 0.0
    %112 = vmatpush1.msra.mxu0 0.0
    %113 = vmatprep.subr.mxu0 0.0
    %114 = vmatpush1.msra.mxu0 0.0
    %115 = vmatprep.subr.mxu0 0.0
    %116 = vmatpush1.msra.mxu0 0.0
    %117 = vmatprep.subr.mxu0 0.0
    %118 = vmatpush1.msra.mxu0 0.0
    %119 = vmatprep.subr.mxu0 0.0
    %120 = vmatpush1.msra.mxu0 0.0
    %121 = vmatprep.subr.mxu0 0.0
    %122 = vmatpush1.msra.mxu0 0.0
    %123 = vmatprep.subr.mxu0 0.0
    %124 = vmatpush1.msra.mxu0 0.0
    %125 = vmatprep.subr.mxu0 0.0
    %126 = vmatpush1.msra.mxu0 0.0
    %127 = vmatprep.subr.mxu0 0.0
    %128 = vmatpush1.msra.mxu0 0.0
    %129 = vmatprep.subr.mxu0 0.0
    %130 = vmatpush1.msra.mxu0 0.0
    %131 = vmatprep.subr.mxu0 0.0
    %132 = vmatpush1.msra.mxu0 0.0
    %133 = vmatprep.subr.mxu0 0.0
    %134 = vmatpush1.msra.mxu0 0.0
    %135 = vmatprep.subr.mxu0 0.0
    %136 = vmatpush1.msra.mxu0 0.0
    %137 = vmatprep.subr.mxu0 0.0
    %138 = vmatpush1.msra.mxu0 0.0
    %139 = vmatprep.subr.mxu0 0.0
    %140 = vmatpush1.msra.mxu0 0.0
    %141 = vmatprep.subr.mxu0 0.0
    %142 = vmatpush1.msra.mxu0 0.0
    %143 = vmatprep.subr.mxu0 0.0
    %144 = vmatpush1.msra.mxu0 0.0
    %145 = vmatprep.subr.mxu0 0.0
    %146 = vmatpush1.msra.mxu0 0.0
    %147 = vmatprep.subr.mxu0 0.0
    %148 = vmatpush1.msra.mxu0 0.0
    %149 = vmatprep.subr.mxu0 0.0
    %150 = vmatpush1.msra.mxu0 0.0
    %151 = vmatprep.subr.mxu0 0.0
    %152 = vmatpush1.msra.mxu0 0.0
    %153 = vmatprep.mubr.f32.mxu0 0.0
    %154 = vmatmul.mubr.f32.gmra.mrb[0].mxu0 %v62
    %v155 = vpop.f32.mrb[0].mxu0
    %v156 = vadd.f32 %v58, %v155
    %v157 = vpop.f32.mrb[0].mxu0
    %158 = vmatprep.mubr.f32.mxu0 0.0
    %159 = vmatmul.mubr.f32.gmra.mrb[0].mxu0 %v65
    %v160 = vpop.f32.mrb[0].mxu0
    %v161 = vadd.f32 %v58, %v160
    %v162 = vpop.f32.mrb[0].mxu0
    %163 = vmatprep.mubr.f32.mxu0 0.0
    %164 = vmatmul.mubr.f32.gmra.mrb[0].mxu0 %v68
    %v165 = vpop.f32.mrb[0].mxu0
    %v166 = vadd.f32 %v58, %v165
    %v167 = vpop.f32.mrb[0].mxu0
    %168 = vmatprep.mubr.f32.mxu0 0.0
    %169 = vmatmul.mubr.f32.gmra.mrb[0].mxu0 %v71
    %v170 = vpop.f32.mrb[0].mxu0
    %v171 = vadd.f32 %v58, %v170
    %v172 = vpop.f32.mrb[0].mxu0
    %173 = vmatprep.mubr.f32.mxu0 0.0
    %174 = vmatmul.mubr.f32.gmra.mrb[0].mxu0 %v74
    %v175 = vpop.f32.mrb[0].mxu0
    %v176 = vadd.f32 %v58, %v175
    %v177 = vpop.f32.mrb[0].mxu0
    %178 = vmatprep.mubr.f32.mxu0 0.0
    %179 = vmatmul.mubr.f32.gmra.mrb[0].mxu0 %v77
    %v180 = vpop.f32.mrb[0].mxu0
    %v181 = vadd.f32 %v58, %v180
    %v182 = vpop.f32.mrb[0].mxu0
    %183 = vmatprep.mubr.f32.mxu0 0.0
    %184 = vmatmul.mubr.f32.gmra.mrb[0].mxu0 %v80
    %v185 = vpop.f32.mrb[0].mxu0
    %v186 = vadd.f32 %v58, %v185
    %v187 = vpop.f32.mrb[0].mxu0
    %188 = vmatprep.mubr.f32.mxu0 0.0
    %189 = vmatmul.mubr.f32.gmra.mrb[0].mxu0 %v83
    %v190 = vpop.f32.mrb[0].mxu0
    %v191 = vadd.f32 %v58, %v190
    %v192 = vpop.f32.mrb[0].mxu0
    %193 = vdwg.mxu0
    %v194 = vld [vmem:[%s3] sm:$0xff]
    %v195 = vld [vmem:[%s3 + $0x8] sm:$0xff]
    %v196 = vld [vmem:[%s3 + $0x10] sm:$0xff]
    %v197 = vld [vmem:[%s3 + $0x18] sm:$0xff]
    %v198 = vld [vmem:[%s4] sm:$0xff]
    %v199 = vld [vmem:[%s4 + $0x8] sm:$0xff]
    %v200 = vld [vmem:[%s4 + $0x10] sm:$0xff]
    %v201 = vld [vmem:[%s4 + $0x18] sm:$0xff]
    %vm202 = vcmask 261120
    %v204 = vsel %vm202, 0.0, 0
    %206 = vmatprep.subr.mxu0 0.0
    %207 = vmatpush1.msra.mxu0 %v194
    %208 = vmatprep.subr.mxu0 0.0
    %209 = vmatpush1.msra.mxu0 %v195
    %210 = vmatprep.subr.mxu0 0.0
    %211 = vmatpush1.msra.mxu0 %v196
    %212 = vmatprep.subr.mxu0 0.0
    %213 = vmatpush1.msra.mxu0 %v197
    %214 = vmatprep.subr.mxu0 0.0
    %215 = vmatpush1.msra.mxu0 0.0
    %216 = vmatprep.subr.mxu0 0.0
    %217 = vmatpush1.msra.mxu0 0.0
    %218 = vmatprep.subr.mxu0 0.0
    %219 = vmatpush1.msra.mxu0 0.0
    %220 = vmatprep.subr.mxu0 0.0
    %221 = vmatpush1.msra.mxu0 0.0
    %222 = vmatprep.subr.mxu0 0.0
    %223 = vmatpush1.msra.mxu0 0.0
    %224 = vmatprep.subr.mxu0 0.0
    %225 = vmatpush1.msra.mxu0 0.0
    %226 = vmatprep.subr.mxu0 0.0
    %227 = vmatpush1.msra.mxu0 0.0
    %228 = vmatprep.subr.mxu0 0.0
    %229 = vmatpush1.msra.mxu0 0.0
    %230 = vmatprep.subr.mxu0 0.0
    %231 = vmatpush1.msra.mxu0 0.0
    %232 = vmatprep.subr.mxu0 0.0
    %233 = vmatpush1.msra.mxu0 0.0
    %234 = vmatprep.subr.mxu0 0.0
    %235 = vmatpush1.msra.mxu0 0.0
    %236 = vmatprep.subr.mxu0 0.0
    %237 = vmatpush1.msra.mxu0 0.0
    %238 = vmatprep.subr.mxu0 0.0
    %239 = vmatpush1.msra.mxu0 0.0
    %240 = vmatprep.subr.mxu0 0.0
    %241 = vmatpush1.msra.mxu0 0.0
    %242 = vmatprep.subr.mxu0 0.0
    %243 = vmatpush1.msra.mxu0 0.0
    %244 = vmatprep.subr.mxu0 0.0
    %245 = vmatpush1.msra.mxu0 0.0
    %246 = vmatprep.subr.mxu0 0.0
    %247 = vmatpush1.msra.mxu0 0.0
    %248 = vmatprep.subr.mxu0 0.0
    %249 = vmatpush1.msra.mxu0 0.0
    %250 = vmatprep.subr.mxu0 0.0
    %251 = vmatpush1.msra.mxu0 0.0
    %252 = vmatprep.subr.mxu0 0.0
    %253 = vmatpush1.msra.mxu0 0.0
    %254 = vmatprep.subr.mxu0 0.0
    %255 = vmatpush1.msra.mxu0 0.0
    %256 = vmatprep.subr.mxu0 0.0
    %257 = vmatpush1.msra.mxu0 0.0
    %258 = vmatprep.subr.mxu0 0.0
    %259 = vmatpush1.msra.mxu0 0.0
    %260 = vmatprep.subr.mxu0 0.0
    %261 = vmatpush1.msra.mxu0 0.0
    %262 = vmatprep.subr.mxu0 0.0
    %263 = vmatpush1.msra.mxu0 0.0
    %264 = vmatprep.subr.mxu0 0.0
    %265 = vmatpush1.msra.mxu0 0.0
    %266 = vmatprep.subr.mxu0 0.0
    %267 = vmatpush1.msra.mxu0 0.0
    %268 = vmatprep.subr.mxu0 0.0
    %269 = vmatpush1.msra.mxu0 0.0
    %270 = vmatprep.mubr.f32.mxu0 0.0
    %271 = vmatmul.mubr.f32.gmra.mrb[0].mxu0 %v204
    %v272 = vpop.f32.mrb[0].mxu0
    %v273 = vadd.f32 0.0, %v272
    %v274 = vpop.f32.mrb[0].mxu0
    %275 = vdwg.mxu0
    %v276 = vadd.f32 %v156, %v273
    %v277 = vtanh.pop %v276
    %v279 = vsel %vm202, %v277, 0
    %281 = vmatprep.subr.mxu0 0.0
    %282 = vmatpush1.msra.mxu0 %v194
    %283 = vmatprep.subr.mxu0 0.0
    %284 = vmatpush1.msra.mxu0 %v195
    %285 = vmatprep.subr.mxu0 0.0
    %286 = vmatpush1.msra.mxu0 %v196
    %287 = vmatprep.subr.mxu0 0.0
    %288 = vmatpush1.msra.mxu0 %v197
    %289 = vmatprep.subr.mxu0 0.0
    %290 = vmatpush1.msra.mxu0 0.0
    %291 = vmatprep.subr.mxu0 0.0
    %292 = vmatpush1.msra.mxu0 0.0
    %293 = vmatprep.subr.mxu0 0.0
    %294 = vmatpush1.msra.mxu0 0.0
    %295 = vmatprep.subr.mxu0 0.0
    %296 = vmatpush1.msra.mxu0 0.0
    %297 = vmatprep.subr.mxu0 0.0
    %298 = vmatpush1.msra.mxu0 0.0
    %299 = vmatprep.subr.mxu0 0.0
    %300 = vmatpush1.msra.mxu0 0.0
    %301 = vmatprep.subr.mxu0 0.0
    %302 = vmatpush1.msra.mxu0 0.0
    %303 = vmatprep.subr.mxu0 0.0
    %304 = vmatpush1.msra.mxu0 0.0
    %305 = vmatprep.subr.mxu0 0.0
    %306 = vmatpush1.msra.mxu0 0.0
    %307 = vmatprep.subr.mxu0 0.0
    %308 = vmatpush1.msra.mxu0 0.0
    %309 = vmatprep.subr.mxu0 0.0
    %310 = vmatpush1.msra.mxu0 0.0
    %311 = vmatprep.subr.mxu0 0.0
    %312 = vmatpush1.msra.mxu0 0.0
    %313 = vmatprep.subr.mxu0 0.0
    %314 = vmatpush1.msra.mxu0 0.0
    %315 = vmatprep.subr.mxu0 0.0
    %316 = vmatpush1.msra.mxu0 0.0
    %317 = vmatprep.subr.mxu0 0.0
    %318 = vmatpush1.msra.mxu0 0.0
    %319 = vmatprep.subr.mxu0 0.0
    %320 = vmatpush1.msra.mxu0 0.0
    %321 = vmatprep.subr.mxu0 0.0
    %322 = vmatpush1.msra.mxu0 0.0
    %323 = vmatprep.subr.mxu0 0.0
    %324 = vmatpush1.msra.mxu0 0.0
    %325 = vmatprep.subr.mxu0 0.0
    %326 = vmatpush1.msra.mxu0 0.0
    %327 = vmatprep.subr.mxu0 0.0
    %328 = vmatpush1.msra.mxu0 0.0
    %329 = vmatprep.subr.mxu0 0.0
    %330 = vmatpush1.msra.mxu0 0.0
    %331 = vmatprep.subr.mxu0 0.0
    %332 = vmatpush1.msra.mxu0 0.0
    %333 = vmatprep.subr.mxu0 0.0
    %334 = vmatpush1.msra.mxu0 0.0
    %335 = vmatprep.subr.mxu0 0.0
    %336 = vmatpush1.msra.mxu0 0.0
    %337 = vmatprep.subr.mxu0 0.0
    %338 = vmatpush1.msra.mxu0 0.0
    %339 = vmatprep.subr.mxu0 0.0
    %340 = vmatpush1.msra.mxu0 0.0
    %341 = vmatprep.subr.mxu0 0.0
    %342 = vmatpush1.msra.mxu0 0.0
    %343 = vmatprep.subr.mxu0 0.0
    %344 = vmatpush1.msra.mxu0 0.0
    %345 = vmatprep.mubr.f32.mxu0 0.0
    %346 = vmatmul.mubr.f32.gmra.mrb[0].mxu0 %v279
    %v347 = vpop.f32.mrb[0].mxu0
    %v348 = vadd.f32 0.0, %v347
    %v349 = vpop.f32.mrb[0].mxu0
    %350 = vdwg.mxu0
    %v351 = vadd.f32 %v161, %v348
    %v352 = vtanh.pop %v351
    %v354 = vsel %vm202, %v352, 0
    %356 = vmatprep.subr.mxu0 0.0
    %357 = vmatpush1.msra.mxu0 %v194
    %358 = vmatprep.subr.mxu0 0.0
    %359 = vmatpush1.msra.mxu0 %v195
    %360 = vmatprep.subr.mxu0 0.0
    %361 = vmatpush1.msra.mxu0 %v196
    %362 = vmatprep.subr.mxu0 0.0
    %363 = vmatpush1.msra.mxu0 %v197
    %364 = vmatprep.subr.mxu0 0.0
    %365 = vmatpush1.msra.mxu0 0.0
    %366 = vmatprep.subr.mxu0 0.0
    %367 = vmatpush1.msra.mxu0 0.0
    %368 = vmatprep.subr.mxu0 0.0
    %369 = vmatpush1.msra.mxu0 0.0
    %370 = vmatprep.subr.mxu0 0.0
    %371 = vmatpush1.msra.mxu0 0.0
    %372 = vmatprep.subr.mxu0 0.0
    %373 = vmatpush1.msra.mxu0 0.0
    %374 = vmatprep.subr.mxu0 0.0
    %375 = vmatpush1.msra.mxu0 0.0
    %376 = vmatprep.subr.mxu0 0.0
    %377 = vmatpush1.msra.mxu0 0.0
    %378 = vmatprep.subr.mxu0 0.0
    %379 = vmatpush1.msra.mxu0 0.0
    %380 = vmatprep.subr.mxu0 0.0
    %381 = vmatpush1.msra.mxu0 0.0
    %382 = vmatprep.subr.mxu0 0.0
    %383 = vmatpush1.msra.mxu0 0.0
    %384 = vmatprep.subr.mxu0 0.0
    %385 = vmatpush1.msra.mxu0 0.0
    %386 = vmatprep.subr.mxu0 0.0
    %387 = vmatpush1.msra.mxu0 0.0
    %388 = vmatprep.subr.mxu0 0.0
    %389 = vmatpush1.msra.mxu0 0.0
    %390 = vmatprep.subr.mxu0 0.0
    %391 = vmatpush1.msra.mxu0 0.0
    %392 = vmatprep.subr.mxu0 0.0
    %393 = vmatpush1.msra.mxu0 0.0
    %394 = vmatprep.subr.mxu0 0.0
    %395 = vmatpush1.msra.mxu0 0.0
    %396 = vmatprep.subr.mxu0 0.0
    %397 = vmatpush1.msra.mxu0 0.0
    %398 = vmatprep.subr.mxu0 0.0
    %399 = vmatpush1.msra.mxu0 0.0
    %400 = vmatprep.subr.mxu0 0.0
    %401 = vmatpush1.msra.mxu0 0.0
    %402 = vmatprep.subr.mxu0 0.0
    %403 = vmatpush1.msra.mxu0 0.0
    %404 = vmatprep.subr.mxu0 0.0
    %405 = vmatpush1.msra.mxu0 0.0
    %406 = vmatprep.subr.mxu0 0.0
    %407 = vmatpush1.msra.mxu0 0.0
    %408 = vmatprep.subr.mxu0 0.0
    %409 = vmatpush1.msra.mxu0 0.0
    %410 = vmatprep.subr.mxu0 0.0
    %411 = vmatpush1.msra.mxu0 0.0
    %412 = vmatprep.subr.mxu0 0.0
    %413 = vmatpush1.msra.mxu0 0.0
    %414 = vmatprep.subr.mxu0 0.0
    %415 = vmatpush1.msra.mxu0 0.0
    %416 = vmatprep.subr.mxu0 0.0
    %417 = vmatpush1.msra.mxu0 0.0
    %418 = vmatprep.subr.mxu0 0.0
    %419 = vmatpush1.msra.mxu0 0.0
    %420 = vmatprep.mubr.f32.mxu0 0.0
    %421 = vmatmul.mubr.f32.gmra.mrb[0].mxu0 %v354
    %v422 = vpop.f32.mrb[0].mxu0
    %v423 = vadd.f32 0.0, %v422
    %v424 = vpop.f32.mrb[0].mxu0
    %425 = vdwg.mxu0
    %v426 = vadd.f32 %v166, %v423
    %v427 = vtanh.pop %v426
    %v429 = vsel %vm202, %v427, 0
    %431 = vmatprep.subr.mxu0 0.0
    %432 = vmatpush1.msra.mxu0 %v194
    %433 = vmatprep.subr.mxu0 0.0
    %434 = vmatpush1.msra.mxu0 %v195
    %435 = vmatprep.subr.mxu0 0.0
    %436 = vmatpush1.msra.mxu0 %v196
    %437 = vmatprep.subr.mxu0 0.0
    %438 = vmatpush1.msra.mxu0 %v197
    %439 = vmatprep.subr.mxu0 0.0
    %440 = vmatpush1.msra.mxu0 0.0
    %441 = vmatprep.subr.mxu0 0.0
    %442 = vmatpush1.msra.mxu0 0.0
    %443 = vmatprep.subr.mxu0 0.0
    %444 = vmatpush1.msra.mxu0 0.0
    %445 = vmatprep.subr.mxu0 0.0
    %446 = vmatpush1.msra.mxu0 0.0
    %447 = vmatprep.subr.mxu0 0.0
    %448 = vmatpush1.msra.mxu0 0.0
    %449 = vmatprep.subr.mxu0 0.0
    %450 = vmatpush1.msra.mxu0 0.0
    %451 = vmatprep.subr.mxu0 0.0
    %452 = vmatpush1.msra.mxu0 0.0
    %453 = vmatprep.subr.mxu0 0.0
    %454 = vmatpush1.msra.mxu0 0.0
    %455 = vmatprep.subr.mxu0 0.0
    %456 = vmatpush1.msra.mxu0 0.0
    %457 = vmatprep.subr.mxu0 0.0
    %458 = vmatpush1.msra.mxu0 0.0
    %459 = vmatprep.subr.mxu0 0.0
    %460 = vmatpush1.msra.mxu0 0.0
    %461 = vmatprep.subr.mxu0 0.0
    %462 = vmatpush1.msra.mxu0 0.0
    %463 = vmatprep.subr.mxu0 0.0
    %464 = vmatpush1.msra.mxu0 0.0
    %465 = vmatprep.subr.mxu0 0.0
    %466 = vmatpush1.msra.mxu0 0.0
    %467 = vmatprep.subr.mxu0 0.0
    %468 = vmatpush1.msra.mxu0 0.0
    %469 = vmatprep.subr.mxu0 0.0
    %470 = vmatpush1.msra.mxu0 0.0
    %471 = vmatprep.subr.mxu0 0.0
    %472 = vmatpush1.msra.mxu0 0.0
    %473 = vmatprep.subr.mxu0 0.0
    %474 = vmatpush1.msra.mxu0 0.0
    %475 = vmatprep.subr.mxu0 0.0
    %476 = vmatpush1.msra.mxu0 0.0
    %477 = vmatprep.subr.mxu0 0.0
    %478 = vmatpush1.msra.mxu0 0.0
    %479 = vmatprep.subr.mxu0 0.0
    %480 = vmatpush1.msra.mxu0 0.0
    %481 = vmatprep.subr.mxu0 0.0
    %482 = vmatpush1.msra.mxu0 0.0
    %483 = vmatprep.subr.mxu0 0.0
    %484 = vmatpush1.msra.mxu0 0.0
    %485 = vmatprep.subr.mxu0 0.0
    %486 = vmatpush1.msra.mxu0 0.0
    %487 = vmatprep.subr.mxu0 0.0
    %488 = vmatpush1.msra.mxu0 0.0
    %489 = vmatprep.subr.mxu0 0.0
    %490 = vmatpush1.msra.mxu0 0.0
    %491 = vmatprep.subr.mxu0 0.0
    %492 = vmatpush1.msra.mxu0 0.0
    %493 = vmatprep.subr.mxu0 0.0
    %494 = vmatpush1.msra.mxu0 0.0
    %495 = vmatprep.mubr.f32.mxu0 0.0
    %496 = vmatmul.mubr.f32.gmra.mrb[0].mxu0 %v429
    %v497 = vpop.f32.mrb[0].mxu0
    %v498 = vadd.f32 0.0, %v497
    %v499 = vpop.f32.mrb[0].mxu0
    %500 = vdwg.mxu0
    %v501 = vadd.f32 %v171, %v498
    %v502 = vtanh.pop %v501
    %v504 = vsel %vm202, %v502, 0
    %506 = vmatprep.subr.mxu0 0.0
    %507 = vmatpush1.msra.mxu0 %v194
    %508 = vmatprep.subr.mxu0 0.0
    %509 = vmatpush1.msra.mxu0 %v195
    %510 = vmatprep.subr.mxu0 0.0
    %511 = vmatpush1.msra.mxu0 %v196
    %512 = vmatprep.subr.mxu0 0.0
    %513 = vmatpush1.msra.mxu0 %v197
    %514 = vmatprep.subr.mxu0 0.0
    %515 = vmatpush1.msra.mxu0 0.0
    %516 = vmatprep.subr.mxu0 0.0
    %517 = vmatpush1.msra.mxu0 0.0
    %518 = vmatprep.subr.mxu0 0.0
    %519 = vmatpush1.msra.mxu0 0.0
    %520 = vmatprep.subr.mxu0 0.0
    %521 = vmatpush1.msra.mxu0 0.0
    %522 = vmatprep.subr.mxu0 0.0
    %523 = vmatpush1.msra.mxu0 0.0
    %524 = vmatprep.subr.mxu0 0.0
    %525 = vmatpush1.msra.mxu0 0.0
    %526 = vmatprep.subr.mxu0 0.0
    %527 = vmatpush1.msra.mxu0 0.0
    %528 = vmatprep.subr.mxu0 0.0
    %529 = vmatpush1.msra.mxu0 0.0
    %530 = vmatprep.subr.mxu0 0.0
    %531 = vmatpush1.msra.mxu0 0.0
    %532 = vmatprep.subr.mxu0 0.0
    %533 = vmatpush1.msra.mxu0 0.0
    %534 = vmatprep.subr.mxu0 0.0
    %535 = vmatpush1.msra.mxu0 0.0
    %536 = vmatprep.subr.mxu0 0.0
    %537 = vmatpush1.msra.mxu0 0.0
    %538 = vmatprep.subr.mxu0 0.0
    %539 = vmatpush1.msra.mxu0 0.0
    %540 = vmatprep.subr.mxu0 0.0
    %541 = vmatpush1.msra.mxu0 0.0
    %542 = vmatprep.subr.mxu0 0.0
    %543 = vmatpush1.msra.mxu0 0.0
    %544 = vmatprep.subr.mxu0 0.0
    %545 = vmatpush1.msra.mxu0 0.0
    %546 = vmatprep.subr.mxu0 0.0
    %547 = vmatpush1.msra.mxu0 0.0
    %548 = vmatprep.subr.mxu0 0.0
    %549 = vmatpush1.msra.mxu0 0.0
    %550 = vmatprep.subr.mxu0 0.0
    %551 = vmatpush1.msra.mxu0 0.0
    %552 = vmatprep.subr.mxu0 0.0
    %553 = vmatpush1.msra.mxu0 0.0
    %554 = vmatprep.subr.mxu0 0.0
    %555 = vmatpush1.msra.mxu0 0.0
    %556 = vmatprep.subr.mxu0 0.0
    %557 = vmatpush1.msra.mxu0 0.0
    %558 = vmatprep.subr.mxu0 0.0
    %559 = vmatpush1.msra.mxu0 0.0
    %560 = vmatprep.subr.mxu0 0.0
    %561 = vmatpush1.msra.mxu0 0.0
    %562 = vmatprep.subr.mxu0 0.0
    %563 = vmatpush1.msra.mxu0 0.0
    %564 = vmatprep.subr.mxu0 0.0
    %565 = vmatpush1.msra.mxu0 0.0
    %566 = vmatprep.subr.mxu0 0.0
    %567 = vmatpush1.msra.mxu0 0.0
    %568 = vmatprep.subr.mxu0 0.0
    %569 = vmatpush1.msra.mxu0 0.0
    %570 = vmatprep.mubr.f32.mxu0 0.0
    %571 = vmatmul.mubr.f32.gmra.mrb[0].mxu0 %v504
    %v572 = vpop.f32.mrb[0].mxu0
    %v573 = vadd.f32 0.0, %v572
    %v574 = vpop.f32.mrb[0].mxu0
    %575 = vdwg.mxu0
    %v576 = vadd.f32 %v176, %v573
    %v577 = vtanh.pop %v576
    %v579 = vsel %vm202, %v577, 0
    %581 = vmatprep.subr.mxu0 0.0
    %582 = vmatpush1.msra.mxu0 %v194
    %583 = vmatprep.subr.mxu0 0.0
    %584 = vmatpush1.msra.mxu0 %v195
    %585 = vmatprep.subr.mxu0 0.0
    %586 = vmatpush1.msra.mxu0 %v196
    %587 = vmatprep.subr.mxu0 0.0
    %588 = vmatpush1.msra.mxu0 %v197
    %589 = vmatprep.subr.mxu0 0.0
    %590 = vmatpush1.msra.mxu0 0.0
    %591 = vmatprep.subr.mxu0 0.0
    %592 = vmatpush1.msra.mxu0 0.0
    %593 = vmatprep.subr.mxu0 0.0
    %594 = vmatpush1.msra.mxu0 0.0
    %595 = vmatprep.subr.mxu0 0.0
    %596 = vmatpush1.msra.mxu0 0.0
    %597 = vmatprep.subr.mxu0 0.0
    %598 = vmatpush1.msra.mxu0 0.0
    %599 = vmatprep.subr.mxu0 0.0
    %600 = vmatpush1.msra.mxu0 0.0
    %601 = vmatprep.subr.mxu0 0.0
    %602 = vmatpush1.msra.mxu0 0.0
    %603 = vmatprep.subr.mxu0 0.0
    %604 = vmatpush1.msra.mxu0 0.0
    %605 = vmatprep.subr.mxu0 0.0
    %606 = vmatpush1.msra.mxu0 0.0
    %607 = vmatprep.subr.mxu0 0.0
    %608 = vmatpush1.msra.mxu0 0.0
    %609 = vmatprep.subr.mxu0 0.0
    %610 = vmatpush1.msra.mxu0 0.0
    %611 = vmatprep.subr.mxu0 0.0
    %612 = vmatpush1.msra.mxu0 0.0
    %613 = vmatprep.subr.mxu0 0.0
    %614 = vmatpush1.msra.mxu0 0.0
    %615 = vmatprep.subr.mxu0 0.0
    %616 = vmatpush1.msra.mxu0 0.0
    %617 = vmatprep.subr.mxu0 0.0
    %618 = vmatpush1.msra.mxu0 0.0
    %619 = vmatprep.subr.mxu0 0.0
    %620 = vmatpush1.msra.mxu0 0.0
    %621 = vmatprep.subr.mxu0 0.0
    %622 = vmatpush1.msra.mxu0 0.0
    %623 = vmatprep.subr.mxu0 0.0
    %624 = vmatpush1.msra.mxu0 0.0
    %625 = vmatprep.subr.mxu0 0.0
    %626 = vmatpush1.msra.mxu0 0.0
    %627 = vmatprep.subr.mxu0 0.0
    %628 = vmatpush1.msra.mxu0 0.0
    %629 = vmatprep.subr.mxu0 0.0
    %630 = vmatpush1.msra.mxu0 0.0
    %631 = vmatprep.subr.mxu0 0.0
    %632 = vmatpush1.msra.mxu0 0.0
    %633 = vmatprep.subr.mxu0 0.0
    %634 = vmatpush1.msra.mxu0 0.0
    %635 = vmatprep.subr.mxu0 0.0
    %636 = vmatpush1.msra.mxu0 0.0
    %637 = vmatprep.subr.mxu0 0.0
    %638 = vmatpush1.msra.mxu0 0.0
    %639 = vmatprep.subr.mxu0 0.0
    %640 = vmatpush1.msra.mxu0 0.0
    %641 = vmatprep.subr.mxu0 0.0
    %642 = vmatpush1.msra.mxu0 0.0
    %643 = vmatprep.subr.mxu0 0.0
    %644 = vmatpush1.msra.mxu0 0.0
    %645 = vmatprep.mubr.f32.mxu0 0.0
    %646 = vmatmul.mubr.f32.gmra.mrb[0].mxu0 %v579
    %v647 = vpop.f32.mrb[0].mxu0
    %v648 = vadd.f32 0.0, %v647
    %v649 = vpop.f32.mrb[0].mxu0
    %650 = vdwg.mxu0
    %v651 = vadd.f32 %v181, %v648
    %v652 = vtanh.pop %v651
    %v654 = vsel %vm202, %v652, 0
    %656 = vmatprep.subr.mxu0 0.0
    %657 = vmatpush1.msra.mxu0 %v194
    %658 = vmatprep.subr.mxu0 0.0
    %659 = vmatpush1.msra.mxu0 %v195
    %660 = vmatprep.subr.mxu0 0.0
    %661 = vmatpush1.msra.mxu0 %v196
    %662 = vmatprep.subr.mxu0 0.0
    %663 = vmatpush1.msra.mxu0 %v197
    %664 = vmatprep.subr.mxu0 0.0
    %665 = vmatpush1.msra.mxu0 0.0
    %666 = vmatprep.subr.mxu0 0.0
    %667 = vmatpush1.msra.mxu0 0.0
    %668 = vmatprep.subr.mxu0 0.0
    %669 = vmatpush1.msra.mxu0 0.0
    %670 = vmatprep.subr.mxu0 0.0
    %671 = vmatpush1.msra.mxu0 0.0
    %672 = vmatprep.subr.mxu0 0.0
    %673 = vmatpush1.msra.mxu0 0.0
    %674 = vmatprep.subr.mxu0 0.0
    %675 = vmatpush1.msra.mxu0 0.0
    %676 = vmatprep.subr.mxu0 0.0
    %677 = vmatpush1.msra.mxu0 0.0
    %678 = vmatprep.subr.mxu0 0.0
    %679 = vmatpush1.msra.mxu0 0.0
    %680 = vmatprep.subr.mxu0 0.0
    %681 = vmatpush1.msra.mxu0 0.0
    %682 = vmatprep.subr.mxu0 0.0
    %683 = vmatpush1.msra.mxu0 0.0
    %684 = vmatprep.subr.mxu0 0.0
    %685 = vmatpush1.msra.mxu0 0.0
    %686 = vmatprep.subr.mxu0 0.0
    %687 = vmatpush1.msra.mxu0 0.0
    %688 = vmatprep.subr.mxu0 0.0
    %689 = vmatpush1.msra.mxu0 0.0
    %690 = vmatprep.subr.mxu0 0.0
    %691 = vmatpush1.msra.mxu0 0.0
    %692 = vmatprep.subr.mxu0 0.0
    %693 = vmatpush1.msra.mxu0 0.0
    %694 = vmatprep.subr.mxu0 0.0
    %695 = vmatpush1.msra.mxu0 0.0
    %696 = vmatprep.subr.mxu0 0.0
    %697 = vmatpush1.msra.mxu0 0.0
    %698 = vmatprep.subr.mxu0 0.0
    %699 = vmatpush1.msra.mxu0 0.0
    %700 = vmatprep.subr.mxu0 0.0
    %701 = vmatpush1.msra.mxu0 0.0
    %702 = vmatprep.subr.mxu0 0.0
    %703 = vmatpush1.msra.mxu0 0.0
    %704 = vmatprep.subr.mxu0 0.0
    %705 = vmatpush1.msra.mxu0 0.0
    %706 = vmatprep.subr.mxu0 0.0
    %707 = vmatpush1.msra.mxu0 0.0
    %708 = vmatprep.subr.mxu0 0.0
    %709 = vmatpush1.msra.mxu0 0.0
    %710 = vmatprep.subr.mxu0 0.0
    %711 = vmatpush1.msra.mxu0 0.0
    %712 = vmatprep.subr.mxu0 0.0
    %713 = vmatpush1.msra.mxu0 0.0
    %714 = vmatprep.subr.mxu0 0.0
    %715 = vmatpush1.msra.mxu0 0.0
    %716 = vmatprep.subr.mxu0 0.0
    %717 = vmatpush1.msra.mxu0 0.0
    %718 = vmatprep.subr.mxu0 0.0
    %719 = vmatpush1.msra.mxu0 0.0
    %720 = vmatprep.mubr.f32.mxu0 0.0
    %721 = vmatmul.mubr.f32.gmra.mrb[0].mxu0 %v654
    %v722 = vpop.f32.mrb[0].mxu0
    %v723 = vadd.f32 0.0, %v722
    %v724 = vpop.f32.mrb[0].mxu0
    %725 = vdwg.mxu0
    %v726 = vadd.f32 %v186, %v723
    %v727 = vtanh.pop %v726
    %v729 = vsel %vm202, %v727, 0
    %731 = vmatprep.subr.mxu0 0.0
    %732 = vmatpush1.msra.mxu0 %v194
    %733 = vmatprep.subr.mxu0 0.0
    %734 = vmatpush1.msra.mxu0 %v195
    %735 = vmatprep.subr.mxu0 0.0
    %736 = vmatpush1.msra.mxu0 %v196
    %737 = vmatprep.subr.mxu0 0.0
    %738 = vmatpush1.msra.mxu0 %v197
    %739 = vmatprep.subr.mxu0 0.0
    %740 = vmatpush1.msra.mxu0 0.0
    %741 = vmatprep.subr.mxu0 0.0
    %742 = vmatpush1.msra.mxu0 0.0
    %743 = vmatprep.subr.mxu0 0.0
    %744 = vmatpush1.msra.mxu0 0.0
    %745 = vmatprep.subr.mxu0 0.0
    %746 = vmatpush1.msra.mxu0 0.0
    %747 = vmatprep.subr.mxu0 0.0
    %748 = vmatpush1.msra.mxu0 0.0
    %749 = vmatprep.subr.mxu0 0.0
    %750 = vmatpush1.msra.mxu0 0.0
    %751 = vmatprep.subr.mxu0 0.0
    %752 = vmatpush1.msra.mxu0 0.0
    %753 = vmatprep.subr.mxu0 0.0
    %754 = vmatpush1.msra.mxu0 0.0
    %755 = vmatprep.subr.mxu0 0.0
    %756 = vmatpush1.msra.mxu0 0.0
    %757 = vmatprep.subr.mxu0 0.0
    %758 = vmatpush1.msra.mxu0 0.0
    %759 = vmatprep.subr.mxu0 0.0
    %760 = vmatpush1.msra.mxu0 0.0
    %761 = vmatprep.subr.mxu0 0.0
    %762 = vmatpush1.msra.mxu0 0.0
    %763 = vmatprep.subr.mxu0 0.0
    %764 = vmatpush1.msra.mxu0 0.0
    %765 = vmatprep.subr.mxu0 0.0
    %766 = vmatpush1.msra.mxu0 0.0
    %767 = vmatprep.subr.mxu0 0.0
    %768 = vmatpush1.msra.mxu0 0.0
    %769 = vmatprep.subr.mxu0 0.0
    %770 = vmatpush1.msra.mxu0 0.0
    %771 = vmatprep.subr.mxu0 0.0
    %772 = vmatpush1.msra.mxu0 0.0
    %773 = vmatprep.subr.mxu0 0.0
    %774 = vmatpush1.msra.mxu0 0.0
    %775 = vmatprep.subr.mxu0 0.0
    %776 = vmatpush1.msra.mxu0 0.0
    %777 = vmatprep.subr.mxu0 0.0
    %778 = vmatpush1.msra.mxu0 0.0
    %779 = vmatprep.subr.mxu0 0.0
    %780 = vmatpush1.msra.mxu0 0.0
    %781 = vmatprep.subr.mxu0 0.0
    %782 = vmatpush1.msra.mxu0 0.0
    %783 = vmatprep.subr.mxu0 0.0
    %784 = vmatpush1.msra.mxu0 0.0
    %785 = vmatprep.subr.mxu0 0.0
    %786 = vmatpush1.msra.mxu0 0.0
    %787 = vmatprep.subr.mxu0 0.0
    %788 = vmatpush1.msra.mxu0 0.0
    %789 = vmatprep.subr.mxu0 0.0
    %790 = vmatpush1.msra.mxu0 0.0
    %791 = vmatprep.subr.mxu0 0.0
    %792 = vmatpush1.msra.mxu0 0.0
    %793 = vmatprep.subr.mxu0 0.0
    %794 = vmatpush1.msra.mxu0 0.0
    %795 = vmatprep.mubr.f32.mxu0 0.0
    %796 = vmatmul.mubr.f32.gmra.mrb[0].mxu0 %v729
    %v797 = vpop.f32.mrb[0].mxu0
    %v798 = vadd.f32 0.0, %v797
    %v799 = vpop.f32.mrb[0].mxu0
    %800 = vdwg.mxu0
    %v801 = vadd.f32 %v191, %v798
    %v802 = vtanh.pop %v801
    %803 = vst.msk [vmem:[#allocation6] sm:$0xff] %vm202, %v802
    %v805 = vsel %vm202, %v802, 0
    %807 = vmatprep.subr.mxu0 0.0
    %808 = vmatpush1.msra.mxu0 %v198
    %809 = vmatprep.subr.mxu0 0.0
    %810 = vmatpush1.msra.mxu0 %v199
    %811 = vmatprep.subr.mxu0 0.0
    %812 = vmatpush1.msra.mxu0 %v200
    %813 = vmatprep.subr.mxu0 0.0
    %814 = vmatpush1.msra.mxu0 %v201
    %815 = vmatprep.subr.mxu0 0.0
    %816 = vmatpush1.msra.mxu0 0.0
    %817 = vmatprep.subr.mxu0 0.0
    %818 = vmatpush1.msra.mxu0 0.0
    %819 = vmatprep.subr.mxu0 0.0
    %820 = vmatpush1.msra.mxu0 0.0
    %821 = vmatprep.subr.mxu0 0.0
    %822 = vmatpush1.msra.mxu0 0.0
    %823 = vmatprep.subr.mxu0 0.0
    %824 = vmatpush1.msra.mxu0 0.0
    %825 = vmatprep.subr.mxu0 0.0
    %826 = vmatpush1.msra.mxu0 0.0
    %827 = vmatprep.subr.mxu0 0.0
    %828 = vmatpush1.msra.mxu0 0.0
    %829 = vmatprep.subr.mxu0 0.0
    %830 = vmatpush1.msra.mxu0 0.0
    %831 = vmatprep.subr.mxu0 0.0
    %832 = vmatpush1.msra.mxu0 0.0
    %833 = vmatprep.subr.mxu0 0.0
    %834 = vmatpush1.msra.mxu0 0.0
    %835 = vmatprep.subr.mxu0 0.0
    %836 = vmatpush1.msra.mxu0 0.0
    %837 = vmatprep.subr.mxu0 0.0
    %838 = vmatpush1.msra.mxu0 0.0
    %839 = vmatprep.subr.mxu0 0.0
    %840 = vmatpush1.msra.mxu0 0.0
    %841 = vmatprep.subr.mxu0 0.0
    %842 = vmatpush1.msra.mxu0 0.0
    %843 = vmatprep.subr.mxu0 0.0
    %844 = vmatpush1.msra.mxu0 0.0
    %845 = vmatprep.subr.mxu0 0.0
    %846 = vmatpush1.msra.mxu0 0.0
    %847 = vmatprep.subr.mxu0 0.0
    %848 = vmatpush1.msra.mxu0 0.0
    %849 = vmatprep.subr.mxu0 0.0
    %850 = vmatpush1.msra.mxu0 0.0
    %851 = vmatprep.subr.mxu0 0.0
    %852 = vmatpush1.msra.mxu0 0.0
    %853 = vmatprep.subr.mxu0 0.0
    %854 = vmatpush1.msra.mxu0 0.0
    %855 = vmatprep.subr.mxu0 0.0
    %856 = vmatpush1.msra.mxu0 0.0
    %857 = vmatprep.subr.mxu0 0.0
    %858 = vmatpush1.msra.mxu0 0.0
    %859 = vmatprep.subr.mxu0 0.0
    %860 = vmatpush1.msra.mxu0 0.0
    %861 = vmatprep.subr.mxu0 0.0
    %862 = vmatpush1.msra.mxu0 0.0
    %863 = vmatprep.subr.mxu0 0.0
    %864 = vmatpush1.msra.mxu0 0.0
    %865 = vmatprep.subr.mxu0 0.0
    %866 = vmatpush1.msra.mxu0 0.0
    %867 = vmatprep.subr.mxu0 0.0
    %868 = vmatpush1.msra.mxu0 0.0
    %869 = vmatprep.subr.mxu0 0.0
    %870 = vmatpush1.msra.mxu0 0.0
    %871 = vmatprep.mubr.f32.mxu0 0.0
    %872 = vmatmul.mubr.f32.gmra.mrb[0].mxu0 %v805
    %v873 = vpop.f32.mrb[0].mxu0
    %v874 = vadd.f32 0.0, %v873
    %v875 = vpop.f32.mrb[0].mxu0
    %876 = vdwg.mxu0
    %878 = vrot.lane.b32.xlu0 %v874, 32
    %v879 = vpop.permute.xlu0 %878
    %v881 = vadd.f32 %v156, %v879
    %v882 = vtanh.pop %v881
    %884 = vrot.lane.b32.xlu0 %v882, 96
    %v885 = vpop.permute.xlu0 %884
    %v886 = vsel %vm202, %v885, 0
    %888 = vmatprep.subr.mxu0 0.0
    %889 = vmatpush1.msra.mxu0 %v198
    %890 = vmatprep.subr.mxu0 0.0
    %891 = vmatpush1.msra.mxu0 %v199
    %892 = vmatprep.subr.mxu0 0.0
    %893 = vmatpush1.msra.mxu0 %v200
    %894 = vmatprep.subr.mxu0 0.0
    %895 = vmatpush1.msra.mxu0 %v201
    %896 = vmatprep.subr.mxu0 0.0
    %897 = vmatpush1.msra.mxu0 0.0
    %898 = vmatprep.subr.mxu0 0.0
    %899 = vmatpush1.msra.mxu0 0.0
    %900 = vmatprep.subr.mxu0 0.0
    %901 = vmatpush1.msra.mxu0 0.0
    %902 = vmatprep.subr.mxu0 0.0
    %903 = vmatpush1.msra.mxu0 0.0
    %904 = vmatprep.subr.mxu0 0.0
    %905 = vmatpush1.msra.mxu0 0.0
    %906 = vmatprep.subr.mxu0 0.0
    %907 = vmatpush1.msra.mxu0 0.0
    %908 = vmatprep.subr.mxu0 0.0
    %909 = vmatpush1.msra.mxu0 0.0
    %910 = vmatprep.subr.mxu0 0.0
    %911 = vmatpush1.msra.mxu0 0.0
    %912 = vmatprep.subr.mxu0 0.0
    %913 = vmatpush1.msra.mxu0 0.0
    %914 = vmatprep.subr.mxu0 0.0
    %915 = vmatpush1.msra.mxu0 0.0
    %916 = vmatprep.subr.mxu0 0.0
    %917 = vmatpush1.msra.mxu0 0.0
    %918 = vmatprep.subr.mxu0 0.0
    %919 = vmatpush1.msra.mxu0 0.0
    %920 = vmatprep.subr.mxu0 0.0
    %921 = vmatpush1.msra.mxu0 0.0
    %922 = vmatprep.subr.mxu0 0.0
    %923 = vmatpush1.msra.mxu0 0.0
    %924 = vmatprep.subr.mxu0 0.0
    %925 = vmatpush1.msra.mxu0 0.0
    %926 = vmatprep.subr.mxu0 0.0
    %927 = vmatpush1.msra.mxu0 0.0
    %928 = vmatprep.subr.mxu0 0.0
    %929 = vmatpush1.msra.mxu0 0.0
    %930 = vmatprep.subr.mxu0 0.0
    %931 = vmatpush1.msra.mxu0 0.0
    %932 = vmatprep.subr.mxu0 0.0
    %933 = vmatpush1.msra.mxu0 0.0
    %934 = vmatprep.subr.mxu0 0.0
    %935 = vmatpush1.msra.mxu0 0.0
    %936 = vmatprep.subr.mxu0 0.0
    %937 = vmatpush1.msra.mxu0 0.0
    %938 = vmatprep.subr.mxu0 0.0
    %939 = vmatpush1.msra.mxu0 0.0
    %940 = vmatprep.subr.mxu0 0.0
    %941 = vmatpush1.msra.mxu0 0.0
    %942 = vmatprep.subr.mxu0 0.0
    %943 = vmatpush1.msra.mxu0 0.0
    %944 = vmatprep.subr.mxu0 0.0
    %945 = vmatpush1.msra.mxu0 0.0
    %946 = vmatprep.subr.mxu0 0.0
    %947 = vmatpush1.msra.mxu0 0.0
    %948 = vmatprep.subr.mxu0 0.0
    %949 = vmatpush1.msra.mxu0 0.0
    %950 = vmatprep.subr.mxu0 0.0
    %951 = vmatpush1.msra.mxu0 0.0
    %952 = vmatprep.mubr.f32.mxu0 0.0
    %953 = vmatmul.mubr.f32.gmra.mrb[0].mxu0 %v886
    %v954 = vpop.f32.mrb[0].mxu0
    %v955 = vadd.f32 0.0, %v954
    %v956 = vpop.f32.mrb[0].mxu0
    %957 = vdwg.mxu0
    %959 = vrot.lane.b32.xlu0 %v955, 32
    %v960 = vpop.permute.xlu0 %959
    %v962 = vadd.f32 %v161, %v960
    %v963 = vtanh.pop %v962
    %965 = vrot.lane.b32.xlu0 %v963, 96
    %v966 = vpop.permute.xlu0 %965
    %v967 = vsel %vm202, %v966, 0
    %969 = vmatprep.subr.mxu0 0.0
    %970 = vmatpush1.msra.mxu0 %v198
    %971 = vmatprep.subr.mxu0 0.0
    %972 = vmatpush1.msra.mxu0 %v199
    %973 = vmatprep.subr.mxu0 0.0
    %974 = vmatpush1.msra.mxu0 %v200
    %975 = vmatprep.subr.mxu0 0.0
    %976 = vmatpush1.msra.mxu0 %v201
    %977 = vmatprep.subr.mxu0 0.0
    %978 = vmatpush1.msra.mxu0 0.0
    %979 = vmatprep.subr.mxu0 0.0
    %980 = vmatpush1.msra.mxu0 0.0
    %981 = vmatprep.subr.mxu0 0.0
    %982 = vmatpush1.msra.mxu0 0.0
    %983 = vmatprep.subr.mxu0 0.0
    %984 = vmatpush1.msra.mxu0 0.0
    %985 = vmatprep.subr.mxu0 0.0
    %986 = vmatpush1.msra.mxu0 0.0
    %987 = vmatprep.subr.mxu0 0.0
    %988 = vmatpush1.msra.mxu0 0.0
    %989 = vmatprep.subr.mxu0 0.0
    %990 = vmatpush1.msra.mxu0 0.0
    %991 = vmatprep.subr.mxu0 0.0
    %992 = vmatpush1.msra.mxu0 0.0
    %993 = vmatprep.subr.mxu0 0.0
    %994 = vmatpush1.msra.mxu0 0.0
    %995 = vmatprep.subr.mxu0 0.0
    %996 = vmatpush1.msra.mxu0 0.0
    %997 = vmatprep.subr.mxu0 0.0
    %998 = vmatpush1.msra.mxu0 0.0
    %999 = vmatprep.subr.mxu0 0.0
    %1000 = vmatpush1.msra.mxu0 0.0
    %1001 = vmatprep.subr.mxu0 0.0
    %1002 = vmatpush1.msra.mxu0 0.0
    %1003 = vmatprep.subr.mxu0 0.0
    %1004 = vmatpush1.msra.mxu0 0.0
    %1005 = vmatprep.subr.mxu0 0.0
    %1006 = vmatpush1.msra.mxu0 0.0
    %1007 = vmatprep.subr.mxu0 0.0
    %1008 = vmatpush1.msra.mxu0 0.0
    %1009 = vmatprep.subr.mxu0 0.0
    %1010 = vmatpush1.msra.mxu0 0.0
    %1011 = vmatprep.subr.mxu0 0.0
    %1012 = vmatpush1.msra.mxu0 0.0
    %1013 = vmatprep.subr.mxu0 0.0
    %1014 = vmatpush1.msra.mxu0 0.0
    %1015 = vmatprep.subr.mxu0 0.0
    %1016 = vmatpush1.msra.mxu0 0.0
    %1017 = vmatprep.subr.mxu0 0.0
    %1018 = vmatpush1.msra.mxu0 0.0
    %1019 = vmatprep.subr.mxu0 0.0
    %1020 = vmatpush1.msra.mxu0 0.0
    %1021 = vmatprep.subr.mxu0 0.0
    %1022 = vmatpush1.msra.mxu0 0.0
    %1023 = vmatprep.subr.mxu0 0.0
    %1024 = vmatpush1.msra.mxu0 0.0
    %1025 = vmatprep.subr.mxu0 0.0
    %1026 = vmatpush1.msra.mxu0 0.0
    %1027 = vmatprep.subr.mxu0 0.0
    %1028 = vmatpush1.msra.mxu0 0.0
    %1029 = vmatprep.subr.mxu0 0.0
    %1030 = vmatpush1.msra.mxu0 0.0
    %1031 = vmatprep.subr.mxu0 0.0
    %1032 = vmatpush1.msra.mxu0 0.0
    %1033 = vmatprep.mubr.f32.mxu0 0.0
    %1034 = vmatmul.mubr.f32.gmra.mrb[0].mxu0 %v967
    %v1035 = vpop.f32.mrb[0].mxu0
    %v1036 = vadd.f32 0.0, %v1035
    %v1037 = vpop.f32.mrb[0].mxu0
    %1038 = vdwg.mxu0
    %1040 = vrot.lane.b32.xlu0 %v1036, 32
    %v1041 = vpop.permute.xlu0 %1040
    %v1043 = vadd.f32 %v166, %v1041
    %v1044 = vtanh.pop %v1043
    %1046 = vrot.lane.b32.xlu0 %v1044, 96
    %v1047 = vpop.permute.xlu0 %1046
    %v1048 = vsel %vm202, %v1047, 0
    %1050 = vmatprep.subr.mxu0 0.0
    %1051 = vmatpush1.msra.mxu0 %v198
    %1052 = vmatprep.subr.mxu0 0.0
    %1053 = vmatpush1.msra.mxu0 %v199
    %1054 = vmatprep.subr.mxu0 0.0
    %1055 = vmatpush1.msra.mxu0 %v200
    %1056 = vmatprep.subr.mxu0 0.0
    %1057 = vmatpush1.msra.mxu0 %v201
    %1058 = vmatprep.subr.mxu0 0.0
    %1059 = vmatpush1.msra.mxu0 0.0
    %1060 = vmatprep.subr.mxu0 0.0
    %1061 = vmatpush1.msra.mxu0 0.0
    %1062 = vmatprep.subr.mxu0 0.0
    %1063 = vmatpush1.msra.mxu0 0.0
    %1064 = vmatprep.subr.mxu0 0.0
    %1065 = vmatpush1.msra.mxu0 0.0
    %1066 = vmatprep.subr.mxu0 0.0
    %1067 = vmatpush1.msra.mxu0 0.0
    %1068 = vmatprep.subr.mxu0 0.0
    %1069 = vmatpush1.msra.mxu0 0.0
    %1070 = vmatprep.subr.mxu0 0.0
    %1071 = vmatpush1.msra.mxu0 0.0
    %1072 = vmatprep.subr.mxu0 0.0
    %1073 = vmatpush1.msra.mxu0 0.0
    %1074 = vmatprep.subr.mxu0 0.0
    %1075 = vmatpush1.msra.mxu0 0.0
    %1076 = vmatprep.subr.mxu0 0.0
    %1077 = vmatpush1.msra.mxu0 0.0
    %1078 = vmatprep.subr.mxu0 0.0
    %1079 = vmatpush1.msra.mxu0 0.0
    %1080 = vmatprep.subr.mxu0 0.0
    %1081 = vmatpush1.msra.mxu0 0.0
    %1082 = vmatprep.subr.mxu0 0.0
    %1083 = vmatpush1.msra.mxu0 0.0
    %1084 = vmatprep.subr.mxu0 0.0
    %1085 = vmatpush1.msra.mxu0 0.0
    %1086 = vmatprep.subr.mxu0 0.0
    %1087 = vmatpush1.msra.mxu0 0.0
    %1088 = vmatprep.subr.mxu0 0.0
    %1089 = vmatpush1.msra.mxu0 0.0
    %1090 = vmatprep.subr.mxu0 0.0
    %1091 = vmatpush1.msra.mxu0 0.0
    %1092 = vmatprep.subr.mxu0 0.0
    %1093 = vmatpush1.msra.mxu0 0.0
    %1094 = vmatprep.subr.mxu0 0.0
    %1095 = vmatpush1.msra.mxu0 0.0
    %1096 = vmatprep.subr.mxu0 0.0
    %1097 = vmatpush1.msra.mxu0 0.0
    %1098 = vmatprep.subr.mxu0 0.0
    %1099 = vmatpush1.msra.mxu0 0.0
    %1100 = vmatprep.subr.mxu0 0.0
    %1101 = vmatpush1.msra.mxu0 0.0
    %1102 = vmatprep.subr.mxu0 0.0
    %1103 = vmatpush1.msra.mxu0 0.0
    %1104 = vmatprep.subr.mxu0 0.0
    %1105 = vmatpush1.msra.mxu0 0.0
    %1106 = vmatprep.subr.mxu0 0.0
    %1107 = vmatpush1.msra.mxu0 0.0
    %1108 = vmatprep.subr.mxu0 0.0
    %1109 = vmatpush1.msra.mxu0 0.0
    %1110 = vmatprep.subr.mxu0 0.0
    %1111 = vmatpush1.msra.mxu0 0.0
    %1112 = vmatprep.subr.mxu0 0.0
    %1113 = vmatpush1.msra.mxu0 0.0
    %1114 = vmatprep.mubr.f32.mxu0 0.0
    %1115 = vmatmul.mubr.f32.gmra.mrb[0].mxu0 %v1048
    %v1116 = vpop.f32.mrb[0].mxu0
    %v1117 = vadd.f32 0.0, %v1116
    %v1118 = vpop.f32.mrb[0].mxu0
    %1119 = vdwg.mxu0
    %1121 = vrot.lane.b32.xlu0 %v1117, 32
    %v1122 = vpop.permute.xlu0 %1121
    %v1124 = vadd.f32 %v171, %v1122
    %v1125 = vtanh.pop %v1124
    %1127 = vrot.lane.b32.xlu0 %v1125, 96
    %v1128 = vpop.permute.xlu0 %1127
    %v1129 = vsel %vm202, %v1128, 0
    %1131 = vmatprep.subr.mxu0 0.0
    %1132 = vmatpush1.msra.mxu0 %v198
    %1133 = vmatprep.subr.mxu0 0.0
    %1134 = vmatpush1.msra.mxu0 %v199
    %1135 = vmatprep.subr.mxu0 0.0
    %1136 = vmatpush1.msra.mxu0 %v200
    %1137 = vmatprep.subr.mxu0 0.0
    %1138 = vmatpush1.msra.mxu0 %v201
    %1139 = vmatprep.subr.mxu0 0.0
    %1140 = vmatpush1.msra.mxu0 0.0
    %1141 = vmatprep.subr.mxu0 0.0
    %1142 = vmatpush1.msra.mxu0 0.0
    %1143 = vmatprep.subr.mxu0 0.0
    %1144 = vmatpush1.msra.mxu0 0.0
    %1145 = vmatprep.subr.mxu0 0.0
    %1146 = vmatpush1.msra.mxu0 0.0
    %1147 = vmatprep.subr.mxu0 0.0
    %1148 = vmatpush1.msra.mxu0 0.0
    %1149 = vmatprep.subr.mxu0 0.0
    %1150 = vmatpush1.msra.mxu0 0.0
    %1151 = vmatprep.subr.mxu0 0.0
    %1152 = vmatpush1.msra.mxu0 0.0
    %1153 = vmatprep.subr.mxu0 0.0
    %1154 = vmatpush1.msra.mxu0 0.0
    %1155 = vmatprep.subr.mxu0 0.0
    %1156 = vmatpush1.msra.mxu0 0.0
    %1157 = vmatprep.subr.mxu0 0.0
    %1158 = vmatpush1.msra.mxu0 0.0
    %1159 = vmatprep.subr.mxu0 0.0
    %1160 = vmatpush1.msra.mxu0 0.0
    %1161 = vmatprep.subr.mxu0 0.0
    %1162 = vmatpush1.msra.mxu0 0.0
    %1163 = vmatprep.subr.mxu0 0.0
    %1164 = vmatpush1.msra.mxu0 0.0
    %1165 = vmatprep.subr.mxu0 0.0
    %1166 = vmatpush1.msra.mxu0 0.0
    %1167 = vmatprep.subr.mxu0 0.0
    %1168 = vmatpush1.msra.mxu0 0.0
    %1169 = vmatprep.subr.mxu0 0.0
    %1170 = vmatpush1.msra.mxu0 0.0
    %1171 = vmatprep.subr.mxu0 0.0
    %1172 = vmatpush1.msra.mxu0 0.0
    %1173 = vmatprep.subr.mxu0 0.0
    %1174 = vmatpush1.msra.mxu0 0.0
    %1175 = vmatprep.subr.mxu0 0.0
    %1176 = vmatpush1.msra.mxu0 0.0
    %1177 = vmatprep.subr.mxu0 0.0
    %1178 = vmatpush1.msra.mxu0 0.0
    %1179 = vmatprep.subr.mxu0 0.0
    %1180 = vmatpush1.msra.mxu0 0.0
    %1181 = vmatprep.subr.mxu0 0.0
    %1182 = vmatpush1.msra.mxu0 0.0
    %1183 = vmatprep.subr.mxu0 0.0
    %1184 = vmatpush1.msra.mxu0 0.0
    %1185 = vmatprep.subr.mxu0 0.0
    %1186 = vmatpush1.msra.mxu0 0.0
    %1187 = vmatprep.subr.mxu0 0.0
    %1188 = vmatpush1.msra.mxu0 0.0
    %1189 = vmatprep.subr.mxu0 0.0
    %1190 = vmatpush1.msra.mxu0 0.0
    %1191 = vmatprep.subr.mxu0 0.0
    %1192 = vmatpush1.msra.mxu0 0.0
    %1193 = vmatprep.subr.mxu0 0.0
    %1194 = vmatpush1.msra.mxu0 0.0
    %1195 = vmatprep.mubr.f32.mxu0 0.0
    %1196 = vmatmul.mubr.f32.gmra.mrb[0].mxu0 %v1129
    %v1197 = vpop.f32.mrb[0].mxu0
    %v1198 = vadd.f32 0.0, %v1197
    %v1199 = vpop.f32.mrb[0].mxu0
    %1200 = vdwg.mxu0
    %1202 = vrot.lane.b32.xlu0 %v1198, 32
    %v1203 = vpop.permute.xlu0 %1202
    %v1205 = vadd.f32 %v176, %v1203
    %v1206 = vtanh.pop %v1205
    %1208 = vrot.lane.b32.xlu0 %v1206, 96
    %v1209 = vpop.permute.xlu0 %1208
    %v1210 = vsel %vm202, %v1209, 0
    %1212 = vmatprep.subr.mxu0 0.0
    %1213 = vmatpush1.msra.mxu0 %v198
    %1214 = vmatprep.subr.mxu0 0.0
    %1215 = vmatpush1.msra.mxu0 %v199
    %1216 = vmatprep.subr.mxu0 0.0
    %1217 = vmatpush1.msra.mxu0 %v200
    %1218 = vmatprep.subr.mxu0 0.0
    %1219 = vmatpush1.msra.mxu0 %v201
    %1220 = vmatprep.subr.mxu0 0.0
    %1221 = vmatpush1.msra.mxu0 0.0
    %1222 = vmatprep.subr.mxu0 0.0
    %1223 = vmatpush1.msra.mxu0 0.0
    %1224 = vmatprep.subr.mxu0 0.0
    %1225 = vmatpush1.msra.mxu0 0.0
    %1226 = vmatprep.subr.mxu0 0.0
    %1227 = vmatpush1.msra.mxu0 0.0
    %1228 = vmatprep.subr.mxu0 0.0
    %1229 = vmatpush1.msra.mxu0 0.0
    %1230 = vmatprep.subr.mxu0 0.0
    %1231 = vmatpush1.msra.mxu0 0.0
    %1232 = vmatprep.subr.mxu0 0.0
    %1233 = vmatpush1.msra.mxu0 0.0
    %1234 = vmatprep.subr.mxu0 0.0
    %1235 = vmatpush1.msra.mxu0 0.0
    %1236 = vmatprep.subr.mxu0 0.0
    %1237 = vmatpush1.msra.mxu0 0.0
    %1238 = vmatprep.subr.mxu0 0.0
    %1239 = vmatpush1.msra.mxu0 0.0
    %1240 = vmatprep.subr.mxu0 0.0
    %1241 = vmatpush1.msra.mxu0 0.0
    %1242 = vmatprep.subr.mxu0 0.0
    %1243 = vmatpush1.msra.mxu0 0.0
    %1244 = vmatprep.subr.mxu0 0.0
    %1245 = vmatpush1.msra.mxu0 0.0
    %1246 = vmatprep.subr.mxu0 0.0
    %1247 = vmatpush1.msra.mxu0 0.0
    %1248 = vmatprep.subr.mxu0 0.0
    %1249 = vmatpush1.msra.mxu0 0.0
    %1250 = vmatprep.subr.mxu0 0.0
    %1251 = vmatpush1.msra.mxu0 0.0
    %1252 = vmatprep.subr.mxu0 0.0
    %1253 = vmatpush1.msra.mxu0 0.0
    %1254 = vmatprep.subr.mxu0 0.0
    %1255 = vmatpush1.msra.mxu0 0.0
    %1256 = vmatprep.subr.mxu0 0.0
    %1257 = vmatpush1.msra.mxu0 0.0
    %1258 = vmatprep.subr.mxu0 0.0
    %1259 = vmatpush1.msra.mxu0 0.0
    %1260 = vmatprep.subr.mxu0 0.0
    %1261 = vmatpush1.msra.mxu0 0.0
    %1262 = vmatprep.subr.mxu0 0.0
    %1263 = vmatpush1.msra.mxu0 0.0
    %1264 = vmatprep.subr.mxu0 0.0
    %1265 = vmatpush1.msra.mxu0 0.0
    %1266 = vmatprep.subr.mxu0 0.0
    %1267 = vmatpush1.msra.mxu0 0.0
    %1268 = vmatprep.subr.mxu0 0.0
    %1269 = vmatpush1.msra.mxu0 0.0
    %1270 = vmatprep.subr.mxu0 0.0
    %1271 = vmatpush1.msra.mxu0 0.0
    %1272 = vmatprep.subr.mxu0 0.0
    %1273 = vmatpush1.msra.mxu0 0.0
    %1274 = vmatprep.subr.mxu0 0.0
    %1275 = vmatpush1.msra.mxu0 0.0
    %1276 = vmatprep.mubr.f32.mxu0 0.0
    %1277 = vmatmul.mubr.f32.gmra.mrb[0].mxu0 %v1210
    %v1278 = vpop.f32.mrb[0].mxu0
    %v1279 = vadd.f32 0.0, %v1278
    %v1280 = vpop.f32.mrb[0].mxu0
    %1281 = vdwg.mxu0
    %1283 = vrot.lane.b32.xlu0 %v1279, 32
    %v1284 = vpop.permute.xlu0 %1283
    %v1286 = vadd.f32 %v181, %v1284
    %v1287 = vtanh.pop %v1286
    %1289 = vrot.lane.b32.xlu0 %v1287, 96
    %v1290 = vpop.permute.xlu0 %1289
    %v1291 = vsel %vm202, %v1290, 0
    %1293 = vmatprep.subr.mxu0 0.0
    %1294 = vmatpush1.msra.mxu0 %v198
    %1295 = vmatprep.subr.mxu0 0.0
    %1296 = vmatpush1.msra.mxu0 %v199
    %1297 = vmatprep.subr.mxu0 0.0
    %1298 = vmatpush1.msra.mxu0 %v200
    %1299 = vmatprep.subr.mxu0 0.0
    %1300 = vmatpush1.msra.mxu0 %v201
    %1301 = vmatprep.subr.mxu0 0.0
    %1302 = vmatpush1.msra.mxu0 0.0
    %1303 = vmatprep.subr.mxu0 0.0
    %1304 = vmatpush1.msra.mxu0 0.0
    %1305 = vmatprep.subr.mxu0 0.0
    %1306 = vmatpush1.msra.mxu0 0.0
    %1307 = vmatprep.subr.mxu0 0.0
    %1308 = vmatpush1.msra.mxu0 0.0
    %1309 = vmatprep.subr.mxu0 0.0
    %1310 = vmatpush1.msra.mxu0 0.0
    %1311 = vmatprep.subr.mxu0 0.0
    %1312 = vmatpush1.msra.mxu0 0.0
    %1313 = vmatprep.subr.mxu0 0.0
    %1314 = vmatpush1.msra.mxu0 0.0
    %1315 = vmatprep.subr.mxu0 0.0
    %1316 = vmatpush1.msra.mxu0 0.0
    %1317 = vmatprep.subr.mxu0 0.0
    %1318 = vmatpush1.msra.mxu0 0.0
    %1319 = vmatprep.subr.mxu0 0.0
    %1320 = vmatpush1.msra.mxu0 0.0
    %1321 = vmatprep.subr.mxu0 0.0
    %1322 = vmatpush1.msra.mxu0 0.0
    %1323 = vmatprep.subr.mxu0 0.0
    %1324 = vmatpush1.msra.mxu0 0.0
    %1325 = vmatprep.subr.mxu0 0.0
    %1326 = vmatpush1.msra.mxu0 0.0
    %1327 = vmatprep.subr.mxu0 0.0
    %1328 = vmatpush1.msra.mxu0 0.0
    %1329 = vmatprep.subr.mxu0 0.0
    %1330 = vmatpush1.msra.mxu0 0.0
    %1331 = vmatprep.subr.mxu0 0.0
    %1332 = vmatpush1.msra.mxu0 0.0
    %1333 = vmatprep.subr.mxu0 0.0
    %1334 = vmatpush1.msra.mxu0 0.0
    %1335 = vmatprep.subr.mxu0 0.0
    %1336 = vmatpush1.msra.mxu0 0.0
    %1337 = vmatprep.subr.mxu0 0.0
    %1338 = vmatpush1.msra.mxu0 0.0
    %1339 = vmatprep.subr.mxu0 0.0
    %1340 = vmatpush1.msra.mxu0 0.0
    %1341 = vmatprep.subr.mxu0 0.0
    %1342 = vmatpush1.msra.mxu0 0.0
    %1343 = vmatprep.subr.mxu0 0.0
    %1344 = vmatpush1.msra.mxu0 0.0
    %1345 = vmatprep.subr.mxu0 0.0
    %1346 = vmatpush1.msra.mxu0 0.0
    %1347 = vmatprep.subr.mxu0 0.0
    %1348 = vmatpush1.msra.mxu0 0.0
    %1349 = vmatprep.subr.mxu0 0.0
    %1350 = vmatpush1.msra.mxu0 0.0
    %1351 = vmatprep.subr.mxu0 0.0
    %1352 = vmatpush1.msra.mxu0 0.0
    %1353 = vmatprep.subr.mxu0 0.0
    %1354 = vmatpush1.msra.mxu0 0.0
    %1355 = vmatprep.subr.mxu0 0.0
    %1356 = vmatpush1.msra.mxu0 0.0
    %1357 = vmatprep.mubr.f32.mxu0 0.0
    %1358 = vmatmul.mubr.f32.gmra.mrb[0].mxu0 %v1291
    %v1359 = vpop.f32.mrb[0].mxu0
    %v1360 = vadd.f32 0.0, %v1359
    %v1361 = vpop.f32.mrb[0].mxu0
    %1362 = vdwg.mxu0
    %1364 = vrot.lane.b32.xlu0 %v1360, 32
    %v1365 = vpop.permute.xlu0 %1364
    %v1367 = vadd.f32 %v186, %v1365
    %v1368 = vtanh.pop %v1367
    %1370 = vrot.lane.b32.xlu0 %v1368, 96
    %v1371 = vpop.permute.xlu0 %1370
    %v1372 = vsel %vm202, %v1371, 0
    %1374 = vmatprep.subr.mxu0 0.0
    %1375 = vmatpush1.msra.mxu0 %v198
    %1376 = vmatprep.subr.mxu0 0.0
    %1377 = vmatpush1.msra.mxu0 %v199
    %1378 = vmatprep.subr.mxu0 0.0
    %1379 = vmatpush1.msra.mxu0 %v200
    %1380 = vmatprep.subr.mxu0 0.0
    %1381 = vmatpush1.msra.mxu0 %v201
    %1382 = vmatprep.subr.mxu0 0.0
    %1383 = vmatpush1.msra.mxu0 0.0
    %1384 = vmatprep.subr.mxu0 0.0
    %1385 = vmatpush1.msra.mxu0 0.0
    %1386 = vmatprep.subr.mxu0 0.0
    %1387 = vmatpush1.msra.mxu0 0.0
    %1388 = vmatprep.subr.mxu0 0.0
    %1389 = vmatpush1.msra.mxu0 0.0
    %1390 = vmatprep.subr.mxu0 0.0
    %1391 = vmatpush1.msra.mxu0 0.0
    %1392 = vmatprep.subr.mxu0 0.0
    %1393 = vmatpush1.msra.mxu0 0.0
    %1394 = vmatprep.subr.mxu0 0.0
    %1395 = vmatpush1.msra.mxu0 0.0
    %1396 = vmatprep.subr.mxu0 0.0
    %1397 = vmatpush1.msra.mxu0 0.0
    %1398 = vmatprep.subr.mxu0 0.0
    %1399 = vmatpush1.msra.mxu0 0.0
    %1400 = vmatprep.subr.mxu0 0.0
    %1401 = vmatpush1.msra.mxu0 0.0
    %1402 = vmatprep.subr.mxu0 0.0
    %1403 = vmatpush1.msra.mxu0 0.0
    %1404 = vmatprep.subr.mxu0 0.0
    %1405 = vmatpush1.msra.mxu0 0.0
    %1406 = vmatprep.subr.mxu0 0.0
    %1407 = vmatpush1.msra.mxu0 0.0
    %1408 = vmatprep.subr.mxu0 0.0
    %1409 = vmatpush1.msra.mxu0 0.0
    %1410 = vmatprep.subr.mxu0 0.0
    %1411 = vmatpush1.msra.mxu0 0.0
    %1412 = vmatprep.subr.mxu0 0.0
    %1413 = vmatpush1.msra.mxu0 0.0
    %1414 = vmatprep.subr.mxu0 0.0
    %1415 = vmatpush1.msra.mxu0 0.0
    %1416 = vmatprep.subr.mxu0 0.0
    %1417 = vmatpush1.msra.mxu0 0.0
    %1418 = vmatprep.subr.mxu0 0.0
    %1419 = vmatpush1.msra.mxu0 0.0
    %1420 = vmatprep.subr.mxu0 0.0
    %1421 = vmatpush1.msra.mxu0 0.0
    %1422 = vmatprep.subr.mxu0 0.0
    %1423 = vmatpush1.msra.mxu0 0.0
    %1424 = vmatprep.subr.mxu0 0.0
    %1425 = vmatpush1.msra.mxu0 0.0
    %1426 = vmatprep.subr.mxu0 0.0
    %1427 = vmatpush1.msra.mxu0 0.0
    %1428 = vmatprep.subr.mxu0 0.0
    %1429 = vmatpush1.msra.mxu0 0.0
    %1430 = vmatprep.subr.mxu0 0.0
    %1431 = vmatpush1.msra.mxu0 0.0
    %1432 = vmatprep.subr.mxu0 0.0
    %1433 = vmatpush1.msra.mxu0 0.0
    %1434 = vmatprep.subr.mxu0 0.0
    %1435 = vmatpush1.msra.mxu0 0.0
    %1436 = vmatprep.subr.mxu0 0.0
    %1437 = vmatpush1.msra.mxu0 0.0
    %1438 = vmatprep.mubr.f32.mxu0 0.0
    %1439 = vmatmul.mubr.f32.gmra.mrb[0].mxu0 %v1372
    %v1440 = vpop.f32.mrb[0].mxu0
    %v1441 = vadd.f32 0.0, %v1440
    %v1442 = vpop.f32.mrb[0].mxu0
    %1443 = vdwg.mxu0
    %1445 = vrot.lane.b32.xlu0 %v1441, 32
    %v1446 = vpop.permute.xlu0 %1445
    %v1448 = vadd.f32 %v191, %v1446
    %v1449 = vtanh.pop %v1448
    %v1450 = vld [vmem:[#allocation2] sm:$0xff]
    %v1451 = vld [vmem:[#allocation2 + $0x8] sm:$0xff]
    %v1452 = vld [vmem:[#allocation2 + $0x10] sm:$0xff]
    %v1453 = vld [vmem:[#allocation2 + $0x18] sm:$0xff]
    %v1454 = vld [vmem:[%s6] sm:$0x1]
    %v1456 = vlaneseq
    %v1457 = vshrl.u32 %v1456, 7
    %v1458 = vsub.s32 0, %v1457
    %v1459 = vrot.slane %v1454, %v1458
    %1462 = vrot.lane.b32.xlu0 %v1449, 96
    %v1463 = vpop.permute.xlu0 %1462
    %v1464 = vsel %vm202, %v1463, 0
    %1466 = vmatprep.subr.mxu0 0.0
    %1467 = vmatpush1.msra.mxu0 %v1450
    %1468 = vmatprep.subr.mxu0 0.0
    %1469 = vmatpush1.msra.mxu0 %v1451
    %1470 = vmatprep.subr.mxu0 0.0
    %1471 = vmatpush1.msra.mxu0 %v1452
    %1472 = vmatprep.subr.mxu0 0.0
    %1473 = vmatpush1.msra.mxu0 %v1453
    %1474 = vmatprep.subr.mxu0 0.0
    %1475 = vmatpush1.msra.mxu0 0.0
    %1476 = vmatprep.subr.mxu0 0.0
    %1477 = vmatpush1.msra.mxu0 0.0
    %1478 = vmatprep.subr.mxu0 0.0
    %1479 = vmatpush1.msra.mxu0 0.0
    %1480 = vmatprep.subr.mxu0 0.0
    %1481 = vmatpush1.msra.mxu0 0.0
    %1482 = vmatprep.subr.mxu0 0.0
    %1483 = vmatpush1.msra.mxu0 0.0
    %1484 = vmatprep.subr.mxu0 0.0
    %1485 = vmatpush1.msra.mxu0 0.0
    %1486 = vmatprep.subr.mxu0 0.0
    %1487 = vmatpush1.msra.mxu0 0.0
    %1488 = vmatprep.subr.mxu0 0.0
    %1489 = vmatpush1.msra.mxu0 0.0
    %1490 = vmatprep.subr.mxu0 0.0
    %1491 = vmatpush1.msra.mxu0 0.0
    %1492 = vmatprep.subr.mxu0 0.0
    %1493 = vmatpush1.msra.mxu0 0.0
    %1494 = vmatprep.subr.mxu0 0.0
    %1495 = vmatpush1.msra.mxu0 0.0
    %1496 = vmatprep.subr.mxu0 0.0
    %1497 = vmatpush1.msra.mxu0 0.0
    %1498 = vmatprep.subr.mxu0 0.0
    %1499 = vmatpush1.msra.mxu0 0.0
    %1500 = vmatprep.subr.mxu0 0.0
    %1501 = vmatpush1.msra.mxu0 0.0
    %1502 = vmatprep.subr.mxu0 0.0
    %1503 = vmatpush1.msra.mxu0 0.0
    %1504 = vmatprep.subr.mxu0 0.0
    %1505 = vmatpush1.msra.mxu0 0.0
    %1506 = vmatprep.subr.mxu0 0.0
    %1507 = vmatpush1.msra.mxu0 0.0
    %1508 = vmatprep.subr.mxu0 0.0
    %1509 = vmatpush1.msra.mxu0 0.0
    %1510 = vmatprep.subr.mxu0 0.0
    %1511 = vmatpush1.msra.mxu0 0.0
    %1512 = vmatprep.subr.mxu0 0.0
    %1513 = vmatpush1.msra.mxu0 0.0
    %1514 = vmatprep.subr.mxu0 0.0
    %1515 = vmatpush1.msra.mxu0 0.0
    %1516 = vmatprep.subr.mxu0 0.0
    %1517 = vmatpush1.msra.mxu0 0.0
    %1518 = vmatprep.subr.mxu0 0.0
    %1519 = vmatpush1.msra.mxu0 0.0
    %1520 = vmatprep.subr.mxu0 0.0
    %1521 = vmatpush1.msra.mxu0 0.0
    %1522 = vmatprep.subr.mxu0 0.0
    %1523 = vmatpush1.msra.mxu0 0.0
    %1524 = vmatprep.subr.mxu0 0.0
    %1525 = vmatpush1.msra.mxu0 0.0
    %1526 = vmatprep.subr.mxu0 0.0
    %1527 = vmatpush1.msra.mxu0 0.0
    %1528 = vmatprep.subr.mxu0 0.0
    %1529 = vmatpush1.msra.mxu0 0.0
    %1530 = vmatprep.mubr.f32.mxu0 0.0
    %1531 = vmatmul.mubr.f32.gmra.mrb[0].mxu0 %v886
    %v1532 = vpop.f32.mrb[0].mxu0
    %v1533 = vadd.f32 %v1459, %v1532
    %v1534 = vpop.f32.mrb[0].mxu0
    %1535 = vmatprep.mubr.f32.mxu0 0.0
    %1536 = vmatmul.mubr.f32.gmra.mrb[0].mxu0 %v967
    %v1537 = vpop.f32.mrb[0].mxu0
    %v1538 = vadd.f32 %v1459, %v1537
    %v1539 = vpop.f32.mrb[0].mxu0
    %1540 = vmatprep.mubr.f32.mxu0 0.0
    %1541 = vmatmul.mubr.f32.gmra.mrb[0].mxu0 %v1048
    %v1542 = vpop.f32.mrb[0].mxu0
    %v1543 = vadd.f32 %v1459, %v1542
    %v1544 = vpop.f32.mrb[0].mxu0
    %1545 = vmatprep.mubr.f32.mxu0 0.0
    %1546 = vmatmul.mubr.f32.gmra.mrb[0].mxu0 %v1129
    %v1547 = vpop.f32.mrb[0].mxu0
    %v1548 = vadd.f32 %v1459, %v1547
    %v1549 = vpop.f32.mrb[0].mxu0
    %1550 = vmatprep.mubr.f32.mxu0 0.0
    %1551 = vmatmul.mubr.f32.gmra.mrb[0].mxu0 %v1210
    %v1552 = vpop.f32.mrb[0].mxu0
    %v1553 = vadd.f32 %v1459, %v1552
    %v1554 = vpop.f32.mrb[0].mxu0
    %1555 = vmatprep.mubr.f32.mxu0 0.0
    %1556 = vmatmul.mubr.f32.gmra.mrb[0].mxu0 %v1291
    %v1557 = vpop.f32.mrb[0].mxu0
    %v1558 = vadd.f32 %v1459, %v1557
    %v1559 = vpop.f32.mrb[0].mxu0
    %1560 = vmatprep.mubr.f32.mxu0 0.0
    %1561 = vmatmul.mubr.f32.gmra.mrb[0].mxu0 %v1372
    %v1562 = vpop.f32.mrb[0].mxu0
    %v1563 = vadd.f32 %v1459, %v1562
    %v1564 = vpop.f32.mrb[0].mxu0
    %1565 = vmatprep.mubr.f32.mxu0 0.0
    %1566 = vmatmul.mubr.f32.gmra.mrb[0].mxu0 %v1464
    %v1567 = vpop.f32.mrb[0].mxu0
    %v1568 = vadd.f32 %v1459, %v1567
    %v1569 = vpop.f32.mrb[0].mxu0
    %1570 = vdwg.mxu0
    %1571 = vst [vmem:[#allocation5] sm:$0xff] %v1533
    %1572 = vst [vmem:[#allocation5 + $0x8] sm:$0xff] %v1538
    %1573 = vst [vmem:[#allocation5 + $0x10] sm:$0xff] %v1543
    %1574 = vst [vmem:[#allocation5 + $0x18] sm:$0xff] %v1548
    %1575 = vst [vmem:[#allocation5 + $0x20] sm:$0xff] %v1553
    %1576 = vst [vmem:[#allocation5 + $0x28] sm:$0xff] %v1558
    %1577 = vst [vmem:[#allocation5 + $0x30] sm:$0xff] %v1563
    %1578 = vst [vmem:[#allocation5 + $0x38] sm:$0xff] %v1568
    // Predicated region
    $region34: #{tpu_custom_call.1} parent=1 // pred_check
      _
    $region35: #{tpu_custom_call.1} parent=1 // pred_check_branch
      %1580 = sbr.rel (0) target = $region37
    $region36: #{tpu_custom_call.1} parent=1 // pred_region
      %s1582 = ssub.s32 1024, 1024
      %1583 = vsyncadd [#allocation4], %s1582
      %s1584 = sshll.u32 [#allocation5], 4
      %s1585 = int_to_ptr.vmem [resolvable:$true] %s1584
      %1590 = dma.vmem_to_hbm [thread:$0]  %s1585, 1024, %s7, [#allocation4], 128, 128, 8
    $region37: #{tpu_custom_call.1} parent=1 // pred_fallthru
      _
    // Predicated region
    $region38: #{tpu_custom_call.1} parent=1 // pred_check
      _
    $region39: #{tpu_custom_call.1} parent=1 // pred_check_branch
      %1592 = sbr.rel (0) target = $region41
    $region40: #{tpu_custom_call.1} parent=1 // pred_region
      %s1594 = ssub.s32 128, 128
      %1595 = vsyncadd [#allocation7], %s1594
      %s1597 = sshll.u32 [#allocation6], 4
      %s1598 = int_to_ptr.vmem [resolvable:$true] %s1597
      %1600 = dma.vmem_to_hbm [thread:$0]  %s1598, 128, %s8, [#allocation7]
    $region41: #{tpu_custom_call.1} parent=1 // pred_fallthru
      _
    // Predicated region
    $region42: #{tpu_custom_call.1} parent=1 // pred_check
      _
    $region43: #{tpu_custom_call.1} parent=1 // pred_check_branch
      %1602 = sbr.rel (0) target = $region45
    $region44: #{tpu_custom_call.1} parent=1 // pred_region
      %1603 = dma.done [#allocation4], 1024
    $region45: #{tpu_custom_call.1} parent=1 // pred_fallthru
      _
    // Predicated region
    $region46: #{tpu_custom_call.1} parent=1 // pred_check
      _
    $region47: #{tpu_custom_call.1} parent=1 // pred_check_branch
      %1605 = sbr.rel (0) target = $region49
    $region48: #{tpu_custom_call.1} parent=1 // pred_region
      %1606 = dma.done [#allocation7], 128
    $region49: #{tpu_custom_call.1} parent=1 // pred_fallthru
      _
    %1607 = vsyncpa [#allocation3], 1
    %1608 = vsyncpa [#allocation4], 1
    %1609 = vsyncpa [#allocation7], 1

</llo_original>
